<compile_context>
chip_gen: v5e
topology: v5e:2x2
jax: 0.10.0
libtpu: 0.0.40
codegen_flags: <defaults>
</compile_context>

<pallas_src>
import functools

import jax
import jax.numpy as jnp
import numpy as np
from jax.experimental import pallas as pl
from jax.experimental.pallas import tpu as pltpu


def _layer_norm(x, g, b, eps=1e-5):
    mu = jnp.mean(x, axis=-1, keepdims=True)
    var = jnp.mean((x - mu) ** 2, axis=-1, keepdims=True)
    return (x - mu) * jax.lax.rsqrt(var + eps) * g + b


def _fft_block_kernel(x_ref, wq_ref, wk_ref, wv_ref, bq_ref, bk_ref, bv_ref,
                      wo_ref, bo_ref, ln1g_ref, ln1b_ref,
                      c1w_ref, c1b_ref, c2w_ref, c2b_ref,
                      ln2g_ref, ln2b_ref, out_ref, attn_sc,
                      *, n_heads, seq_len):
    x = x_ref[...]                               # (M, E) f32 rows, M = block_b*L
    M, E = x.shape
    L = seq_len
    bb = M // L                                  # batch items packed in this block
    d = E // n_heads
    scale = 1.0 / float(d) ** 0.5

    x_bf = x.astype(jnp.bfloat16)

    # ---- QKV projections: full-E contraction over all packed rows ----
    q = jnp.dot(x_bf, wq_ref[...], preferred_element_type=jnp.float32) + bq_ref[...]
    k = jnp.dot(x_bf, wk_ref[...], preferred_element_type=jnp.float32) + bk_ref[...]
    v = jnp.dot(x_bf, wv_ref[...], preferred_element_type=jnp.float32) + bv_ref[...]
    q_bf = (q * scale).astype(jnp.bfloat16)      # scale once in f32, then cast
    k_bf = k.astype(jnp.bfloat16)
    v_bf = v.astype(jnp.bfloat16)

    # ---- multi-head self attention (dropout: inference no-op) ----
    # Each head's normalized output is written into the (M, E) bf16 scratch
    # slab; the output projection runs ONCE with K=E after the loop.
    for h in range(n_heads):                     # static, unrolled
        sl = slice(h * d, (h + 1) * d)
        qh = q_bf[:, sl].reshape(bb, L, d)
        kh = k_bf[:, sl].reshape(bb, L, d)
        vh = v_bf[:, sl].reshape(bb, L, d)
        # contract last axes (no materialized k^T), batched over bb items
        s = jnp.einsum("bld,bmd->blm", qh, kh,
                       preferred_element_type=jnp.float32)            # (bb, L, L)
        s = s - jnp.max(s, axis=-1, keepdims=True)
        p = jnp.exp(s)
        inv = pl.reciprocal(jnp.sum(p, axis=-1, keepdims=True), approx=True)
        oh = jnp.einsum("blm,bmd->bld", p.astype(jnp.bfloat16), vh,
                        preferred_element_type=jnp.float32) * inv     # (bb, L, d)
        attn_sc[:, sl] = oh.reshape(M, d).astype(jnp.bfloat16)

    attn = jnp.dot(attn_sc[...], wo_ref[...],
                   preferred_element_type=jnp.float32) + bo_ref[...]  # (M, E)

    # ---- residual + layer norm 1 (f32) ----
    h1 = _layer_norm(attn + x, ln1g_ref[...], ln1b_ref[...])

    # ---- conv block: Conv1d(k=3, padding='same') as 3 shifted matmuls ----
    # Edge masks built once (per-batch-item sequence boundaries) and reused
    # for both conv layers; roll happens on the flattened (M, .) slab.
    row = jax.lax.broadcasted_iota(jnp.int32, (M, 1), 0)
    first_row = (row % L) == 0                   # rows whose t-1 neighbor is padding
    last_row = (row % L) == (L - 1)              # rows whose t+1 neighbor is padding

    def taps(y):
        prev = jnp.where(first_row, 0.0, pltpu.roll(y, shift=1, axis=0))
        nxt = jnp.where(last_row, 0.0, pltpu.roll(y, shift=M - 1, axis=0))
        return prev.astype(jnp.bfloat16), nxt.astype(jnp.bfloat16)

    prev1, next1 = taps(h1)
    c1 = jnp.dot(h1.astype(jnp.bfloat16), c1w_ref[1], preferred_element_type=jnp.float32)
    c1 += jnp.dot(prev1, c1w_ref[0], preferred_element_type=jnp.float32)
    c1 += jnp.dot(next1, c1w_ref[2], preferred_element_type=jnp.float32)
    c1 = jnp.maximum(c1 + c1b_ref[...], 0.0)                          # (M, C) ReLU

    prev2, next2 = taps(c1)
    c2 = jnp.dot(c1.astype(jnp.bfloat16), c2w_ref[1], preferred_element_type=jnp.float32)
    c2 += jnp.dot(prev2, c2w_ref[0], preferred_element_type=jnp.float32)
    c2 += jnp.dot(next2, c2w_ref[2], preferred_element_type=jnp.float32)
    c2 = jnp.maximum(c2 + c2b_ref[...], 0.0)                          # (M, E) ReLU
    # (ReLU after BOTH convs matches the PyTorch Sequential in the spec.)

    # ---- residual + layer norm 2 (f32) ----
    out_ref[...] = _layer_norm(c2 + h1, ln2g_ref[...], ln2b_ref[...])


def prepare_params(params):
    """One-time bf16 cast of MXU weight operands (hoisted out of the call path).

    Biases and LayerNorm params stay f32.
    """
    bf = lambda a: a.astype(jnp.bfloat16)
    return (
        bf(params["wq"]), bf(params["wk"]), bf(params["wv"]),
        params["bq"], params["bk"], params["bv"],
        bf(params["wo"]), params["bo"],
        params["ln1_g"], params["ln1_b"],
        bf(params["conv1_w"]), params["conv1_b"],
        bf(params["conv2_w"]), params["conv2_b"],
        params["ln2_g"], params["ln2_b"],
    )


def _pick_block_batch(B, L, target_rows=256):
    """Largest divisor of B with block_b*L <= target_rows (256-wide MXU on
    v6e/v7x), while keeping >=2 grid steps when B allows so both v7x
    TensorCores get work."""
    best = 1
    for bb in range(1, B + 1):
        if B % bb == 0 and bb * L <= target_rows:
            best = bb
    if best > 1 and B // best < 2:
        for bb in range(best - 1, 0, -1):
            if B % bb == 0 and B // bb >= 2:
                best = bb
                break
    return best


@functools.partial(jax.jit, static_argnames=("n_heads", "block_b"))
def fft_block(x, prepared, n_heads, block_b=None):
    B, L, E = x.shape
    assert E % n_heads == 0
    C = prepared[10].shape[-1]                   # conv1_w is (3, E, C)

    if block_b is None:
        block_b = _pick_block_batch(B, L)
    assert B % block_b == 0
    M = block_b * L
    grid = (B // block_b,)

    x_flat = x.reshape(B * L, E)                 # pack rows into the matmul M dim

    def full_spec(shape):
        nd = len(shape)
        return pl.BlockSpec(shape, lambda b, _nd=nd: (0,) * _nd)

    in_specs = [pl.BlockSpec((M, E), lambda b: (b, 0))]
    in_specs += [full_spec(p.shape) for p in prepared]
    out_spec = pl.BlockSpec((M, E), lambda b: (b, 0))

    flops_per_item = (
        3 * 2 * L * E * E        # q/k/v projections
        + 2 * 2 * L * L * E      # scores + probs@v across all heads
        + 2 * L * E * E          # output projection
        + 3 * 2 * L * E * C      # conv1 (3 taps)
        + 3 * 2 * L * C * E)     # conv2 (3 taps)
    param_bytes = sum(int(np.prod(p.shape)) * p.dtype.itemsize for p in prepared)
    cost = pl.CostEstimate(
        flops=B * flops_per_item,
        transcendentals=B * (n_heads * L * L + n_heads * L + 2 * L),
        bytes_accessed=2 * B * L * E * 4 + param_bytes)

    kernel = functools.partial(_fft_block_kernel, n_heads=n_heads, seq_len=L)
    out_flat = pl.pallas_call(
        kernel,
        out_shape=jax.ShapeDtypeStruct((B * L, E), jnp.float32),
        grid_spec=pltpu.PrefetchScalarGridSpec(
            num_scalar_prefetch=0,
            grid=grid,
            in_specs=in_specs,
            out_specs=out_spec,
            scratch_shapes=[pltpu.VMEM((M, E), jnp.bfloat16)],   # per-step head slab
        ),
        compiler_params=pltpu.CompilerParams(
            dimension_semantics=("parallel",),
            vmem_limit_bytes=32 * 1024 * 1024),
        cost_estimate=cost,
    )(x_flat, *prepared)
    return out_flat.reshape(B, L, E)


def fft_block_ref(x, p, n_heads, matmul_dtype=jnp.float32):
    """Pure-JAX reference (same math as the PyTorch module, eval mode)."""
    B, L, E = x.shape
    d = E // n_heads
    f32 = jnp.float32

    def mm(a, b):
        return jnp.matmul(a.astype(matmul_dtype), b.astype(matmul_dtype),
                          preferred_element_type=f32)

    q = mm(x, p["wq"]) + p["bq"]
    k = mm(x, p["wk"]) + p["bk"]
    v = mm(x, p["wv"]) + p["bv"]
    qh = (q / jnp.sqrt(float(d))).reshape(B, L, n_heads, d).astype(matmul_dtype)
    kh = k.reshape(B, L, n_heads, d).astype(matmul_dtype)
    vh = v.reshape(B, L, n_heads, d).astype(matmul_dtype)
    s = jnp.einsum("blhd,bmhd->bhlm", qh, kh, preferred_element_type=f32)
    pa = jax.nn.softmax(s, axis=-1)
    o = jnp.einsum("bhlm,bmhd->blhd", pa.astype(matmul_dtype), vh,
                   preferred_element_type=f32).reshape(B, L, E)
    attn = mm(o, p["wo"]) + p["bo"]

    def ln(z, g, b):
        mu = z.mean(-1, keepdims=True)
        var = ((z - mu) ** 2).mean(-1, keepdims=True)
        return (z - mu) / jnp.sqrt(var + 1e-5) * g + b

    h1 = ln(attn + x, p["ln1_g"], p["ln1_b"])

    def conv(h, w, bias):  # w: (3, in, out); tap 0 -> t-1, tap 2 -> t+1
        prev = jnp.pad(h, ((0, 0), (1, 0), (0, 0)))[:, :-1]
        nxt = jnp.pad(h, ((0, 0), (0, 1), (0, 0)))[:, 1:]
        return mm(prev, w[0]) + mm(h, w[1]) + mm(nxt, w[2]) + bias

    c1 = jax.nn.relu(conv(h1, p["conv1_w"], p["conv1_b"]))
    c2 = jax.nn.relu(conv(c1, p["conv2_w"], p["conv2_b"]))
    return ln(c2 + h1, p["ln2_g"], p["ln2_b"])


def make_params(key, embed_dim, conv_channels):
    ks = jax.random.split(key, 12)

    def rnd(k, shape, scale=0.1):
        return (scale * jax.random.normal(k, shape)).astype(jnp.float32)

    E, C = embed_dim, conv_channels
    return {
        # attention projections, pre-transposed so y = x @ W (+ b)
        "wq": rnd(ks[0], (E, E)), "wk": rnd(ks[1], (E, E)), "wv": rnd(ks[2], (E, E)),
        "bq": rnd(ks[3], (1, E)), "bk": rnd(ks[4], (1, E)), "bv": rnd(ks[5], (1, E)),
        "wo": rnd(ks[6], (E, E)), "bo": rnd(ks[7], (1, E)),
        "ln1_g": jnp.ones((1, E), jnp.float32), "ln1_b": jnp.zeros((1, E), jnp.float32),
        # Conv1d weights reshaped from PyTorch (out, in, 3) to (tap, in, out)
        "conv1_w": rnd(ks[8], (3, E, C)), "conv1_b": rnd(ks[9], (1, C)),
        "conv2_w": rnd(ks[10], (3, C, E)), "conv2_b": rnd(ks[11], (1, E)),
        "ln2_g": jnp.ones((1, E), jnp.float32), "ln2_b": jnp.zeros((1, E), jnp.float32),
    }


if __name__ == "__main__":
    B, L, E = 4, 8, 32          # (batch, seq length, embedding dim)
    n_heads = 4
    conv_channels = 64

    key = jax.random.PRNGKey(0)
    k_x, k_p = jax.random.split(key)
    x = jax.random.normal(k_x, (B, L, E), jnp.float32)
    params = make_params(k_p, E, conv_channels)
    prepared = prepare_params(params)    # bf16 weight cast done once, outside the call

    out = jax.block_until_ready(
        fft_block(x, prepared, n_heads=n_heads, block_b=None))

    # Structural check: reference with matching bf16 matmul-operand precision.
    ref_bf16 = jax.block_until_ready(
        fft_block_ref(x, params, n_heads, matmul_dtype=jnp.bfloat16))
    np.testing.assert_allclose(np.asarray(out), np.asarray(ref_bf16),
                               rtol=1e-2, atol=1e-2)

    # Precision check: full-f32 reference; slack covers bf16 operand rounding
    # and the approx softmax reciprocal.
    ref_f32 = jax.block_until_ready(
        fft_block_ref(x, params, n_heads, matmul_dtype=jnp.float32))
    np.testing.assert_allclose(np.asarray(out), np.asarray(ref_f32),
                               rtol=3e-2, atol=3e-2)

    print("KERNEL_OK")
</pallas_src>

<mosaic_0001>
module attributes {stable_mosaic.version = 11 : i64} {
  func.func @_fft_block_kernel(%arg0: i32, %arg1: memref<16x32xf32, #tpu.memory_space<vmem>>, %arg2: memref<32x32xbf16, #tpu.memory_space<vmem>>, %arg3: memref<32x32xbf16, #tpu.memory_space<vmem>>, %arg4: memref<32x32xbf16, #tpu.memory_space<vmem>>, %arg5: memref<1x32xf32, #tpu.memory_space<vmem>>, %arg6: memref<1x32xf32, #tpu.memory_space<vmem>>, %arg7: memref<1x32xf32, #tpu.memory_space<vmem>>, %arg8: memref<32x32xbf16, #tpu.memory_space<vmem>>, %arg9: memref<1x32xf32, #tpu.memory_space<vmem>>, %arg10: memref<1x32xf32, #tpu.memory_space<vmem>>, %arg11: memref<1x32xf32, #tpu.memory_space<vmem>>, %arg12: memref<3x32x64xbf16, #tpu.memory_space<vmem>>, %arg13: memref<1x64xf32, #tpu.memory_space<vmem>>, %arg14: memref<3x64x32xbf16, #tpu.memory_space<vmem>>, %arg15: memref<1x32xf32, #tpu.memory_space<vmem>>, %arg16: memref<1x32xf32, #tpu.memory_space<vmem>>, %arg17: memref<1x32xf32, #tpu.memory_space<vmem>>, %arg18: memref<16x32xf32, #tpu.memory_space<vmem>>, %arg19: memref<16x32xbf16, #tpu.memory_space<vmem>>) attributes {dimension_semantics = [#tpu.dimension_semantics<parallel>], iteration_bounds = array<i64: 2>, scalar_prefetch = 0 : i64, scratch_operands = 1 : i64, tpu.core_type = #tpu.core_type<tc>, window_params = [{transform_indices = @transform_0, window_bounds = array<i64: 16, 32>}, {pipeline_mode = #tpu.pipeline_mode<synchronous>, transform_indices = @transform_1, window_bounds = array<i64: 32, 32>}, {pipeline_mode = #tpu.pipeline_mode<synchronous>, transform_indices = @transform_2, window_bounds = array<i64: 32, 32>}, {pipeline_mode = #tpu.pipeline_mode<synchronous>, transform_indices = @transform_3, window_bounds = array<i64: 32, 32>}, {pipeline_mode = #tpu.pipeline_mode<synchronous>, transform_indices = @transform_4, window_bounds = array<i64: 1, 32>}, {pipeline_mode = #tpu.pipeline_mode<synchronous>, transform_indices = @transform_5, window_bounds = array<i64: 1, 32>}, {pipeline_mode = #tpu.pipeline_mode<synchronous>, transform_indices = @transform_6, window_bounds = array<i64: 1, 32>}, {pipeline_mode = #tpu.pipeline_mode<synchronous>, transform_indices = @transform_7, window_bounds = array<i64: 32, 32>}, {pipeline_mode = #tpu.pipeline_mode<synchronous>, transform_indices = @transform_8, window_bounds = array<i64: 1, 32>}, {pipeline_mode = #tpu.pipeline_mode<synchronous>, transform_indices = @transform_9, window_bounds = array<i64: 1, 32>}, {pipeline_mode = #tpu.pipeline_mode<synchronous>, transform_indices = @transform_10, window_bounds = array<i64: 1, 32>}, {pipeline_mode = #tpu.pipeline_mode<synchronous>, transform_indices = @transform_11, window_bounds = array<i64: 3, 32, 64>}, {pipeline_mode = #tpu.pipeline_mode<synchronous>, transform_indices = @transform_12, window_bounds = array<i64: 1, 64>}, {pipeline_mode = #tpu.pipeline_mode<synchronous>, transform_indices = @transform_13, window_bounds = array<i64: 3, 64, 32>}, {pipeline_mode = #tpu.pipeline_mode<synchronous>, transform_indices = @transform_14, window_bounds = array<i64: 1, 32>}, {pipeline_mode = #tpu.pipeline_mode<synchronous>, transform_indices = @transform_15, window_bounds = array<i64: 1, 32>}, {pipeline_mode = #tpu.pipeline_mode<synchronous>, transform_indices = @transform_16, window_bounds = array<i64: 1, 32>}, {transform_indices = @transform_17, window_bounds = array<i64: 16, 32>}]} {
    %c0 = arith.constant 0 : index
    %c0_0 = arith.constant 0 : index
    %0 = vector.load %arg1[%c0, %c0_0] : memref<16x32xf32, #tpu.memory_space<vmem>>, vector<16x32xf32>
    %1 = arith.truncf %0 : vector<16x32xf32> to vector<16x32xbf16>
    %c0_1 = arith.constant 0 : index
    %c0_2 = arith.constant 0 : index
    %2 = vector.load %arg2[%c0_1, %c0_2] : memref<32x32xbf16, #tpu.memory_space<vmem>>, vector<32x32xbf16>
    %cst = arith.constant dense<0.000000e+00> : vector<16x32xf32>
    %3 = tpu.matmul %1, %2, %cst {dimension_numbers = #tpu.dot_dimension_numbers<[1], [0], [0], [1], [0, 0, 1, 1], [], []>} : vector<16x32xbf16>, vector<32x32xbf16>, vector<16x32xf32> -> vector<16x32xf32>
    %c0_3 = arith.constant 0 : index
    %c0_4 = arith.constant 0 : index
    %4 = vector.load %arg5[%c0_3, %c0_4] : memref<1x32xf32, #tpu.memory_space<vmem>>, vector<1x32xf32>
    %5 = vector.broadcast %4 : vector<1x32xf32> to vector<16x32xf32>
    %6 = arith.addf %3, %5 : vector<16x32xf32>
    %c0_5 = arith.constant 0 : index
    %c0_6 = arith.constant 0 : index
    %7 = vector.load %arg3[%c0_5, %c0_6] : memref<32x32xbf16, #tpu.memory_space<vmem>>, vector<32x32xbf16>
    %cst_7 = arith.constant dense<0.000000e+00> : vector<16x32xf32>
    %8 = tpu.matmul %1, %7, %cst_7 {dimension_numbers = #tpu.dot_dimension_numbers<[1], [0], [0], [1], [0, 0, 1, 1], [], []>} : vector<16x32xbf16>, vector<32x32xbf16>, vector<16x32xf32> -> vector<16x32xf32>
    %c0_8 = arith.constant 0 : index
    %c0_9 = arith.constant 0 : index
    %9 = vector.load %arg6[%c0_8, %c0_9] : memref<1x32xf32, #tpu.memory_space<vmem>>, vector<1x32xf32>
    %10 = vector.broadcast %9 : vector<1x32xf32> to vector<16x32xf32>
    %11 = arith.addf %8, %10 : vector<16x32xf32>
    %c0_10 = arith.constant 0 : index
    %c0_11 = arith.constant 0 : index
    %12 = vector.load %arg4[%c0_10, %c0_11] : memref<32x32xbf16, #tpu.memory_space<vmem>>, vector<32x32xbf16>
    %cst_12 = arith.constant dense<0.000000e+00> : vector<16x32xf32>
    %13 = tpu.matmul %1, %12, %cst_12 {dimension_numbers = #tpu.dot_dimension_numbers<[1], [0], [0], [1], [0, 0, 1, 1], [], []>} : vector<16x32xbf16>, vector<32x32xbf16>, vector<16x32xf32> -> vector<16x32xf32>
    %c0_13 = arith.constant 0 : index
    %c0_14 = arith.constant 0 : index
    %14 = vector.load %arg7[%c0_13, %c0_14] : memref<1x32xf32, #tpu.memory_space<vmem>>, vector<1x32xf32>
    %15 = vector.broadcast %14 : vector<1x32xf32> to vector<16x32xf32>
    %16 = arith.addf %13, %15 : vector<16x32xf32>
    %cst_15 = arith.constant 0.353553385 : f32
    %17 = vector.broadcast %cst_15 : f32 to vector<16x32xf32>
    %18 = arith.mulf %6, %17 : vector<16x32xf32>
    %19 = arith.truncf %18 : vector<16x32xf32> to vector<16x32xbf16>
    %20 = arith.truncf %11 : vector<16x32xf32> to vector<16x32xbf16>
    %21 = arith.truncf %16 : vector<16x32xf32> to vector<16x32xbf16>
    %22 = vector.extract_strided_slice %19 {offsets = [0, 0], sizes = [16, 8], strides = [1, 1]} : vector<16x32xbf16> to vector<16x8xbf16>
    %23 = vector.shape_cast %22 : vector<16x8xbf16> to vector<2x8x8xbf16>
    %24 = vector.extract_strided_slice %20 {offsets = [0, 0], sizes = [16, 8], strides = [1, 1]} : vector<16x32xbf16> to vector<16x8xbf16>
    %25 = vector.shape_cast %24 : vector<16x8xbf16> to vector<2x8x8xbf16>
    %26 = vector.extract_strided_slice %21 {offsets = [0, 0], sizes = [16, 8], strides = [1, 1]} : vector<16x32xbf16> to vector<16x8xbf16>
    %27 = vector.shape_cast %26 : vector<16x8xbf16> to vector<2x8x8xbf16>
    "tpu.trace_start"() <{level = 10 : i32, message = "bld,bmd->blm"}> : () -> ()
    %cst_16 = arith.constant dense<0.000000e+00> : vector<2x8x8xf32>
    %28 = tpu.matmul %23, %25, %cst_16 {dimension_numbers = #tpu.dot_dimension_numbers<[2], [2], [1], [1], [0, 0, 0, 1, 1, 1], [0], [0]>} : vector<2x8x8xbf16>, vector<2x8x8xbf16>, vector<2x8x8xf32> -> vector<2x8x8xf32>
    "tpu.trace_stop"() : () -> ()
    %cst_17 = arith.constant dense<0xFF800000> : vector<2x8xf32>
    %29 = vector.multi_reduction <maximumf>, %28, %cst_17 [2] : vector<2x8x8xf32> to vector<2x8xf32>
    %30 = vector.shape_cast %29 : vector<2x8xf32> to vector<2x8x1xf32>
    %31 = vector.broadcast %30 : vector<2x8x1xf32> to vector<2x8x8xf32>
    %32 = arith.subf %28, %31 : vector<2x8x8xf32>
    %33 = math.exp %32 : vector<2x8x8xf32>
    %cst_18 = arith.constant dense<0.000000e+00> : vector<2x8xf32>
    %34 = vector.multi_reduction <add>, %33, %cst_18 [2] : vector<2x8x8xf32> to vector<2x8xf32>
    %35 = vector.shape_cast %34 : vector<2x8xf32> to vector<2x8x1xf32>
    %36 = tpu.reciprocal %35 {approx = true} : vector<2x8x1xf32> -> vector<2x8x1xf32>
    %37 = arith.truncf %33 : vector<2x8x8xf32> to vector<2x8x8xbf16>
    "tpu.trace_start"() <{level = 10 : i32, message = "blm,bmd->bld"}> : () -> ()
    %cst_19 = arith.constant dense<0.000000e+00> : vector<2x8x8xf32>
    %38 = tpu.matmul %37, %27, %cst_19 {dimension_numbers = #tpu.dot_dimension_numbers<[2], [1], [1], [2], [0, 0, 0, 1, 1, 2], [0], [0]>} : vector<2x8x8xbf16>, vector<2x8x8xbf16>, vector<2x8x8xf32> -> vector<2x8x8xf32>
    "tpu.trace_stop"() : () -> ()
    %39 = vector.broadcast %36 : vector<2x8x1xf32> to vector<2x8x8xf32>
    %40 = arith.mulf %38, %39 : vector<2x8x8xf32>
    %41 = vector.shape_cast %40 : vector<2x8x8xf32> to vector<16x8xf32>
    %42 = arith.truncf %41 : vector<16x8xf32> to vector<16x8xbf16>
    %c0_20 = arith.constant 0 : index
    %c0_21 = arith.constant 0 : index
    %43 = vector.load %arg19[%c0_20, %c0_21] : memref<16x32xbf16, #tpu.memory_space<vmem>>, vector<16x8xbf16>
    tpu.vector_store %arg19[%c0_20, %c0_21], %42 {strides = array<i32>} : memref<16x32xbf16, #tpu.memory_space<vmem>>, vector<16x8xbf16>,
    %44 = vector.extract_strided_slice %19 {offsets = [0, 8], sizes = [16, 8], strides = [1, 1]} : vector<16x32xbf16> to vector<16x8xbf16>
    %45 = vector.shape_cast %44 : vector<16x8xbf16> to vector<2x8x8xbf16>
    %46 = vector.extract_strided_slice %20 {offsets = [0, 8], sizes = [16, 8], strides = [1, 1]} : vector<16x32xbf16> to vector<16x8xbf16>
    %47 = vector.shape_cast %46 : vector<16x8xbf16> to vector<2x8x8xbf16>
    %48 = vector.extract_strided_slice %21 {offsets = [0, 8], sizes = [16, 8], strides = [1, 1]} : vector<16x32xbf16> to vector<16x8xbf16>
    %49 = vector.shape_cast %48 : vector<16x8xbf16> to vector<2x8x8xbf16>
    "tpu.trace_start"() <{level = 10 : i32, message = "bld,bmd->blm"}> : () -> ()
    %cst_22 = arith.constant dense<0.000000e+00> : vector<2x8x8xf32>
    %50 = tpu.matmul %45, %47, %cst_22 {dimension_numbers = #tpu.dot_dimension_numbers<[2], [2], [1], [1], [0, 0, 0, 1, 1, 1], [0], [0]>} : vector<2x8x8xbf16>, vector<2x8x8xbf16>, vector<2x8x8xf32> -> vector<2x8x8xf32>
    "tpu.trace_stop"() : () -> ()
    %cst_23 = arith.constant dense<0xFF800000> : vector<2x8xf32>
    %51 = vector.multi_reduction <maximumf>, %50, %cst_23 [2] : vector<2x8x8xf32> to vector<2x8xf32>
    %52 = vector.shape_cast %51 : vector<2x8xf32> to vector<2x8x1xf32>
    %53 = vector.broadcast %52 : vector<2x8x1xf32> to vector<2x8x8xf32>
    %54 = arith.subf %50, %53 : vector<2x8x8xf32>
    %55 = math.exp %54 : vector<2x8x8xf32>
    %cst_24 = arith.constant dense<0.000000e+00> : vector<2x8xf32>
    %56 = vector.multi_reduction <add>, %55, %cst_24 [2] : vector<2x8x8xf32> to vector<2x8xf32>
    %57 = vector.shape_cast %56 : vector<2x8xf32> to vector<2x8x1xf32>
    %58 = tpu.reciprocal %57 {approx = true} : vector<2x8x1xf32> -> vector<2x8x1xf32>
    %59 = arith.truncf %55 : vector<2x8x8xf32> to vector<2x8x8xbf16>
    "tpu.trace_start"() <{level = 10 : i32, message = "blm,bmd->bld"}> : () -> ()
    %cst_25 = arith.constant dense<0.000000e+00> : vector<2x8x8xf32>
    %60 = tpu.matmul %59, %49, %cst_25 {dimension_numbers = #tpu.dot_dimension_numbers<[2], [1], [1], [2], [0, 0, 0, 1, 1, 2], [0], [0]>} : vector<2x8x8xbf16>, vector<2x8x8xbf16>, vector<2x8x8xf32> -> vector<2x8x8xf32>
    "tpu.trace_stop"() : () -> ()
    %61 = vector.broadcast %58 : vector<2x8x1xf32> to vector<2x8x8xf32>
    %62 = arith.mulf %60, %61 : vector<2x8x8xf32>
    %63 = vector.shape_cast %62 : vector<2x8x8xf32> to vector<16x8xf32>
    %64 = arith.truncf %63 : vector<16x8xf32> to vector<16x8xbf16>
    %c0_26 = arith.constant 0 : index
    %c8 = arith.constant 8 : index
    %65 = vector.load %arg19[%c0_26, %c8] : memref<16x32xbf16, #tpu.memory_space<vmem>>, vector<16x8xbf16>
    tpu.vector_store %arg19[%c0_26, %c8], %64 {strides = array<i32>} : memref<16x32xbf16, #tpu.memory_space<vmem>>, vector<16x8xbf16>,
    %66 = vector.extract_strided_slice %19 {offsets = [0, 16], sizes = [16, 8], strides = [1, 1]} : vector<16x32xbf16> to vector<16x8xbf16>
    %67 = vector.shape_cast %66 : vector<16x8xbf16> to vector<2x8x8xbf16>
    %68 = vector.extract_strided_slice %20 {offsets = [0, 16], sizes = [16, 8], strides = [1, 1]} : vector<16x32xbf16> to vector<16x8xbf16>
    %69 = vector.shape_cast %68 : vector<16x8xbf16> to vector<2x8x8xbf16>
    %70 = vector.extract_strided_slice %21 {offsets = [0, 16], sizes = [16, 8], strides = [1, 1]} : vector<16x32xbf16> to vector<16x8xbf16>
    %71 = vector.shape_cast %70 : vector<16x8xbf16> to vector<2x8x8xbf16>
    "tpu.trace_start"() <{level = 10 : i32, message = "bld,bmd->blm"}> : () -> ()
    %cst_27 = arith.constant dense<0.000000e+00> : vector<2x8x8xf32>
    %72 = tpu.matmul %67, %69, %cst_27 {dimension_numbers = #tpu.dot_dimension_numbers<[2], [2], [1], [1], [0, 0, 0, 1, 1, 1], [0], [0]>} : vector<2x8x8xbf16>, vector<2x8x8xbf16>, vector<2x8x8xf32> -> vector<2x8x8xf32>
    "tpu.trace_stop"() : () -> ()
    %cst_28 = arith.constant dense<0xFF800000> : vector<2x8xf32>
    %73 = vector.multi_reduction <maximumf>, %72, %cst_28 [2] : vector<2x8x8xf32> to vector<2x8xf32>
    %74 = vector.shape_cast %73 : vector<2x8xf32> to vector<2x8x1xf32>
    %75 = vector.broadcast %74 : vector<2x8x1xf32> to vector<2x8x8xf32>
    %76 = arith.subf %72, %75 : vector<2x8x8xf32>
    %77 = math.exp %76 : vector<2x8x8xf32>
    %cst_29 = arith.constant dense<0.000000e+00> : vector<2x8xf32>
    %78 = vector.multi_reduction <add>, %77, %cst_29 [2] : vector<2x8x8xf32> to vector<2x8xf32>
    %79 = vector.shape_cast %78 : vector<2x8xf32> to vector<2x8x1xf32>
    %80 = tpu.reciprocal %79 {approx = true} : vector<2x8x1xf32> -> vector<2x8x1xf32>
    %81 = arith.truncf %77 : vector<2x8x8xf32> to vector<2x8x8xbf16>
    "tpu.trace_start"() <{level = 10 : i32, message = "blm,bmd->bld"}> : () -> ()
    %cst_30 = arith.constant dense<0.000000e+00> : vector<2x8x8xf32>
    %82 = tpu.matmul %81, %71, %cst_30 {dimension_numbers = #tpu.dot_dimension_numbers<[2], [1], [1], [2], [0, 0, 0, 1, 1, 2], [0], [0]>} : vector<2x8x8xbf16>, vector<2x8x8xbf16>, vector<2x8x8xf32> -> vector<2x8x8xf32>
    "tpu.trace_stop"() : () -> ()
    %83 = vector.broadcast %80 : vector<2x8x1xf32> to vector<2x8x8xf32>
    %84 = arith.mulf %82, %83 : vector<2x8x8xf32>
    %85 = vector.shape_cast %84 : vector<2x8x8xf32> to vector<16x8xf32>
    %86 = arith.truncf %85 : vector<16x8xf32> to vector<16x8xbf16>
    %c0_31 = arith.constant 0 : index
    %c16 = arith.constant 16 : index
    %87 = vector.load %arg19[%c0_31, %c16] : memref<16x32xbf16, #tpu.memory_space<vmem>>, vector<16x8xbf16>
    tpu.vector_store %arg19[%c0_31, %c16], %86 {strides = array<i32>} : memref<16x32xbf16, #tpu.memory_space<vmem>>, vector<16x8xbf16>,
    %88 = vector.extract_strided_slice %19 {offsets = [0, 24], sizes = [16, 8], strides = [1, 1]} : vector<16x32xbf16> to vector<16x8xbf16>
    %89 = vector.shape_cast %88 : vector<16x8xbf16> to vector<2x8x8xbf16>
    %90 = vector.extract_strided_slice %20 {offsets = [0, 24], sizes = [16, 8], strides = [1, 1]} : vector<16x32xbf16> to vector<16x8xbf16>
    %91 = vector.shape_cast %90 : vector<16x8xbf16> to vector<2x8x8xbf16>
    %92 = vector.extract_strided_slice %21 {offsets = [0, 24], sizes = [16, 8], strides = [1, 1]} : vector<16x32xbf16> to vector<16x8xbf16>
    %93 = vector.shape_cast %92 : vector<16x8xbf16> to vector<2x8x8xbf16>
    "tpu.trace_start"() <{level = 10 : i32, message = "bld,bmd->blm"}> : () -> ()
    %cst_32 = arith.constant dense<0.000000e+00> : vector<2x8x8xf32>
    %94 = tpu.matmul %89, %91, %cst_32 {dimension_numbers = #tpu.dot_dimension_numbers<[2], [2], [1], [1], [0, 0, 0, 1, 1, 1], [0], [0]>} : vector<2x8x8xbf16>, vector<2x8x8xbf16>, vector<2x8x8xf32> -> vector<2x8x8xf32>
    "tpu.trace_stop"() : () -> ()
    %cst_33 = arith.constant dense<0xFF800000> : vector<2x8xf32>
    %95 = vector.multi_reduction <maximumf>, %94, %cst_33 [2] : vector<2x8x8xf32> to vector<2x8xf32>
    %96 = vector.shape_cast %95 : vector<2x8xf32> to vector<2x8x1xf32>
    %97 = vector.broadcast %96 : vector<2x8x1xf32> to vector<2x8x8xf32>
    %98 = arith.subf %94, %97 : vector<2x8x8xf32>
    %99 = math.exp %98 : vector<2x8x8xf32>
    %cst_34 = arith.constant dense<0.000000e+00> : vector<2x8xf32>
    %100 = vector.multi_reduction <add>, %99, %cst_34 [2] : vector<2x8x8xf32> to vector<2x8xf32>
    %101 = vector.shape_cast %100 : vector<2x8xf32> to vector<2x8x1xf32>
    %102 = tpu.reciprocal %101 {approx = true} : vector<2x8x1xf32> -> vector<2x8x1xf32>
    %103 = arith.truncf %99 : vector<2x8x8xf32> to vector<2x8x8xbf16>
    "tpu.trace_start"() <{level = 10 : i32, message = "blm,bmd->bld"}> : () -> ()
    %cst_35 = arith.constant dense<0.000000e+00> : vector<2x8x8xf32>
    %104 = tpu.matmul %103, %93, %cst_35 {dimension_numbers = #tpu.dot_dimension_numbers<[2], [1], [1], [2], [0, 0, 0, 1, 1, 2], [0], [0]>} : vector<2x8x8xbf16>, vector<2x8x8xbf16>, vector<2x8x8xf32> -> vector<2x8x8xf32>
    "tpu.trace_stop"() : () -> ()
    %105 = vector.broadcast %102 : vector<2x8x1xf32> to vector<2x8x8xf32>
    %106 = arith.mulf %104, %105 : vector<2x8x8xf32>
    %107 = vector.shape_cast %106 : vector<2x8x8xf32> to vector<16x8xf32>
    %108 = arith.truncf %107 : vector<16x8xf32> to vector<16x8xbf16>
    %c0_36 = arith.constant 0 : index
    %c24 = arith.constant 24 : index
    %109 = vector.load %arg19[%c0_36, %c24] : memref<16x32xbf16, #tpu.memory_space<vmem>>, vector<16x8xbf16>
    tpu.vector_store %arg19[%c0_36, %c24], %108 {strides = array<i32>} : memref<16x32xbf16, #tpu.memory_space<vmem>>, vector<16x8xbf16>,
    %c0_37 = arith.constant 0 : index
    %c0_38 = arith.constant 0 : index
    %110 = vector.load %arg19[%c0_37, %c0_38] : memref<16x32xbf16, #tpu.memory_space<vmem>>, vector<16x32xbf16>
    %c0_39 = arith.constant 0 : index
    %c0_40 = arith.constant 0 : index
    %111 = vector.load %arg8[%c0_39, %c0_40] : memref<32x32xbf16, #tpu.memory_space<vmem>>, vector<32x32xbf16>
    %cst_41 = arith.constant dense<0.000000e+00> : vector<16x32xf32>
    %112 = tpu.matmul %110, %111, %cst_41 {dimension_numbers = #tpu.dot_dimension_numbers<[1], [0], [0], [1], [0, 0, 1, 1], [], []>} : vector<16x32xbf16>, vector<32x32xbf16>, vector<16x32xf32> -> vector<16x32xf32>
    %c0_42 = arith.constant 0 : index
    %c0_43 = arith.constant 0 : index
    %113 = vector.load %arg9[%c0_42, %c0_43] : memref<1x32xf32, #tpu.memory_space<vmem>>, vector<1x32xf32>
    %114 = vector.broadcast %113 : vector<1x32xf32> to vector<16x32xf32>
    %115 = arith.addf %112, %114 : vector<16x32xf32>
    %116 = arith.addf %115, %0 : vector<16x32xf32>
    %c0_44 = arith.constant 0 : index
    %c0_45 = arith.constant 0 : index
    %117 = vector.load %arg10[%c0_44, %c0_45] : memref<1x32xf32, #tpu.memory_space<vmem>>, vector<1x32xf32>
    %c0_46 = arith.constant 0 : index
    %c0_47 = arith.constant 0 : index
    %118 = vector.load %arg11[%c0_46, %c0_47] : memref<1x32xf32, #tpu.memory_space<vmem>>, vector<1x32xf32>
    %cst_48 = arith.constant dense<0.000000e+00> : vector<16xf32>
    %119 = vector.multi_reduction <add>, %116, %cst_48 [1] : vector<16x32xf32> to vector<16xf32>
    %120 = vector.shape_cast %119 : vector<16xf32> to vector<16x1xf32>
    %cst_49 = arith.constant 3.200000e+01 : f32
    %121 = vector.broadcast %cst_49 : f32 to vector<16x1xf32>
    %122 = arith.divf %120, %121 : vector<16x1xf32>
    %123 = vector.broadcast %122 : vector<16x1xf32> to vector<16x32xf32>
    %124 = arith.subf %116, %123 : vector<16x32xf32>
    %125 = arith.mulf %124, %124 : vector<16x32xf32>
    %cst_50 = arith.constant dense<0.000000e+00> : vector<16xf32>
    %126 = vector.multi_reduction <add>, %125, %cst_50 [1] : vector<16x32xf32> to vector<16xf32>
    %127 = vector.shape_cast %126 : vector<16xf32> to vector<16x1xf32>
    %cst_51 = arith.constant 3.200000e+01 : f32
    %128 = vector.broadcast %cst_51 : f32 to vector<16x1xf32>
    %129 = arith.divf %127, %128 : vector<16x1xf32>
    %130 = vector.broadcast %122 : vector<16x1xf32> to vector<16x32xf32>
    %131 = arith.subf %116, %130 : vector<16x32xf32>
    %cst_52 = arith.constant 9.99999974E-6 : f32
    %132 = vector.broadcast %cst_52 : f32 to vector<16x1xf32>
    %133 = arith.addf %129, %132 : vector<16x1xf32>
    %134 = math.rsqrt %133 : vector<16x1xf32>
    %135 = vector.broadcast %134 : vector<16x1xf32> to vector<16x32xf32>
    %136 = arith.mulf %131, %135 : vector<16x32xf32>
    %137 = vector.broadcast %117 : vector<1x32xf32> to vector<16x32xf32>
    %138 = arith.mulf %136, %137 : vector<16x32xf32>
    %139 = vector.broadcast %118 : vector<1x32xf32> to vector<16x32xf32>
    %140 = arith.addf %138, %139 : vector<16x32xf32>
    %141 = tpu.iota {dimensions = array<i32: 0>} : vector<16x1xi32>
    %c8_i32 = arith.constant 8 : i32
    %c0_i32 = arith.constant 0 : i32
    %142 = arith.cmpi eq, %c8_i32, %c0_i32 : i32
    %c1_i32 = arith.constant 1 : i32
    %143 = arith.select %142, %c1_i32, %c8_i32 : i32
    %144 = vector.broadcast %143 : i32 to vector<16x1xi32>
    %145 = arith.remsi %141, %144 : vector<16x1xi32>
    %c0_i32_53 = arith.constant 0 : i32
    %146 = vector.broadcast %c0_i32_53 : i32 to vector<16x1xi32>
    %147 = arith.cmpi ne, %145, %146 : vector<16x1xi32>
    %c0_i32_54 = arith.constant 0 : i32
    %148 = vector.broadcast %c0_i32_54 : i32 to vector<16x1xi32>
    %149 = arith.cmpi slt, %145, %148 : vector<16x1xi32>
    %c0_i32_55 = arith.constant 0 : i32
    %150 = arith.cmpi slt, %143, %c0_i32_55 : i32
    %151 = vector.broadcast %150 : i1 to vector<16x1xi1>
    %152 = vector.broadcast %151 : vector<16x1xi1> to vector<16x1xi1>
    %153 = arith.xori %149, %152 : vector<16x1xi1>
    %154 = arith.andi %153, %147 : vector<16x1xi1>
    %155 = vector.broadcast %143 : i32 to vector<16x1xi32>
    %156 = arith.addi %145, %155 : vector<16x1xi32>
    %157 = arith.select %154, %156, %145 : vector<16x1xi1>, vector<16x1xi32>
    %c0_i32_56 = arith.constant 0 : i32
    %158 = vector.broadcast %c0_i32_56 : i32 to vector<16x1xi32>
    %159 = arith.cmpi eq, %157, %158 : vector<16x1xi32>
    %c8_i32_57 = arith.constant 8 : i32
    %c0_i32_58 = arith.constant 0 : i32
    %160 = arith.cmpi eq, %c8_i32_57, %c0_i32_58 : i32
    %c1_i32_59 = arith.constant 1 : i32
    %161 = arith.select %160, %c1_i32_59, %c8_i32_57 : i32
    %162 = vector.broadcast %161 : i32 to vector<16x1xi32>
    %163 = arith.remsi %141, %162 : vector<16x1xi32>
    %c0_i32_60 = arith.constant 0 : i32
    %164 = vector.broadcast %c0_i32_60 : i32 to vector<16x1xi32>
    %165 = arith.cmpi ne, %163, %164 : vector<16x1xi32>
    %c0_i32_61 = arith.constant 0 : i32
    %166 = vector.broadcast %c0_i32_61 : i32 to vector<16x1xi32>
    %167 = arith.cmpi slt, %163, %166 : vector<16x1xi32>
    %c0_i32_62 = arith.constant 0 : i32
    %168 = arith.cmpi slt, %161, %c0_i32_62 : i32
    %169 = vector.broadcast %168 : i1 to vector<16x1xi1>
    %170 = vector.broadcast %169 : vector<16x1xi1> to vector<16x1xi1>
    %171 = arith.xori %167, %170 : vector<16x1xi1>
    %172 = arith.andi %171, %165 : vector<16x1xi1>
    %173 = vector.broadcast %161 : i32 to vector<16x1xi32>
    %174 = arith.addi %163, %173 : vector<16x1xi32>
    %175 = arith.select %172, %174, %163 : vector<16x1xi1>, vector<16x1xi32>
    %c7_i32 = arith.constant 7 : i32
    %176 = vector.broadcast %c7_i32 : i32 to vector<16x1xi32>
    %177 = arith.cmpi eq, %175, %176 : vector<16x1xi32>
    %c1_i32_63 = arith.constant 1 : i32
    %178 = tpu.dynamic_rotate %140 by %c1_i32_63 dim 0 : vector<16x32xf32>, i32 -> vector<16x32xf32>
    %cst_64 = arith.constant 0.000000e+00 : f32
    %179 = vector.shape_cast %159 : vector<16x1xi1> to vector<16x1xi1>
    %180 = vector.broadcast %179 : vector<16x1xi1> to vector<16x32xi1>
    %181 = vector.broadcast %cst_64 : f32 to vector<16x32xf32>
    %182 = arith.select %180, %181, %178 : vector<16x32xi1>, vector<16x32xf32>
    %c15_i32 = arith.constant 15 : i32
    %183 = tpu.dynamic_rotate %140 by %c15_i32 dim 0 : vector<16x32xf32>, i32 -> vector<16x32xf32>
    %cst_65 = arith.constant 0.000000e+00 : f32
    %184 = vector.shape_cast %177 : vector<16x1xi1> to vector<16x1xi1>
    %185 = vector.broadcast %184 : vector<16x1xi1> to vector<16x32xi1>
    %186 = vector.broadcast %cst_65 : f32 to vector<16x32xf32>
    %187 = arith.select %185, %186, %183 : vector<16x32xi1>, vector<16x32xf32>
    %188 = arith.truncf %182 : vector<16x32xf32> to vector<16x32xbf16>
    %189 = arith.truncf %187 : vector<16x32xf32> to vector<16x32xbf16>
    %190 = arith.truncf %140 : vector<16x32xf32> to vector<16x32xbf16>
    %c1 = arith.constant 1 : index
    %c0_66 = arith.constant 0 : index
    %c0_67 = arith.constant 0 : index
    %191 = vector.load %arg12[%c1, %c0_66, %c0_67] : memref<3x32x64xbf16, #tpu.memory_space<vmem>>, vector<1x32x64xbf16>
    %192 = vector.shape_cast %191 : vector<1x32x64xbf16> to vector<32x64xbf16>
    %cst_68 = arith.constant dense<0.000000e+00> : vector<16x64xf32>
    %193 = tpu.matmul %190, %192, %cst_68 {dimension_numbers = #tpu.dot_dimension_numbers<[1], [0], [0], [1], [0, 0, 1, 1], [], []>} : vector<16x32xbf16>, vector<32x64xbf16>, vector<16x64xf32> -> vector<16x64xf32>
    %c0_69 = arith.constant 0 : index
    %c0_70 = arith.constant 0 : index
    %c0_71 = arith.constant 0 : index
    %194 = vector.load %arg12[%c0_69, %c0_70, %c0_71] : memref<3x32x64xbf16, #tpu.memory_space<vmem>>, vector<1x32x64xbf16>
    %195 = vector.shape_cast %194 : vector<1x32x64xbf16> to vector<32x64xbf16>
    %cst_72 = arith.constant dense<0.000000e+00> : vector<16x64xf32>
    %196 = tpu.matmul %188, %195, %cst_72 {dimension_numbers = #tpu.dot_dimension_numbers<[1], [0], [0], [1], [0, 0, 1, 1], [], []>} : vector<16x32xbf16>, vector<32x64xbf16>, vector<16x64xf32> -> vector<16x64xf32>
    %197 = arith.addf %193, %196 : vector<16x64xf32>
    %c2 = arith.constant 2 : index
    %c0_73 = arith.constant 0 : index
    %c0_74 = arith.constant 0 : index
    %198 = vector.load %arg12[%c2, %c0_73, %c0_74] : memref<3x32x64xbf16, #tpu.memory_space<vmem>>, vector<1x32x64xbf16>
    %199 = vector.shape_cast %198 : vector<1x32x64xbf16> to vector<32x64xbf16>
    %cst_75 = arith.constant dense<0.000000e+00> : vector<16x64xf32>
    %200 = tpu.matmul %189, %199, %cst_75 {dimension_numbers = #tpu.dot_dimension_numbers<[1], [0], [0], [1], [0, 0, 1, 1], [], []>} : vector<16x32xbf16>, vector<32x64xbf16>, vector<16x64xf32> -> vector<16x64xf32>
    %201 = arith.addf %197, %200 : vector<16x64xf32>
    %c0_76 = arith.constant 0 : index
    %c0_77 = arith.constant 0 : index
    %202 = vector.load %arg13[%c0_76, %c0_77] : memref<1x64xf32, #tpu.memory_space<vmem>>, vector<1x64xf32>
    %203 = vector.broadcast %202 : vector<1x64xf32> to vector<16x64xf32>
    %204 = arith.addf %201, %203 : vector<16x64xf32>
    %cst_78 = arith.constant 0.000000e+00 : f32
    %205 = vector.broadcast %cst_78 : f32 to vector<16x64xf32>
    %206 = arith.maximumf %204, %205 : vector<16x64xf32>
    %c1_i32_79 = arith.constant 1 : i32
    %207 = tpu.dynamic_rotate %206 by %c1_i32_79 dim 0 : vector<16x64xf32>, i32 -> vector<16x64xf32>
    %cst_80 = arith.constant 0.000000e+00 : f32
    %208 = vector.shape_cast %159 : vector<16x1xi1> to vector<16x1xi1>
    %209 = vector.broadcast %208 : vector<16x1xi1> to vector<16x64xi1>
    %210 = vector.broadcast %cst_80 : f32 to vector<16x64xf32>
    %211 = arith.select %209, %210, %207 : vector<16x64xi1>, vector<16x64xf32>
    %c15_i32_81 = arith.constant 15 : i32
    %212 = tpu.dynamic_rotate %206 by %c15_i32_81 dim 0 : vector<16x64xf32>, i32 -> vector<16x64xf32>
    %cst_82 = arith.constant 0.000000e+00 : f32
    %213 = vector.shape_cast %177 : vector<16x1xi1> to vector<16x1xi1>
    %214 = vector.broadcast %213 : vector<16x1xi1> to vector<16x64xi1>
    %215 = vector.broadcast %cst_82 : f32 to vector<16x64xf32>
    %216 = arith.select %214, %215, %212 : vector<16x64xi1>, vector<16x64xf32>
    %217 = arith.truncf %211 : vector<16x64xf32> to vector<16x64xbf16>
    %218 = arith.truncf %216 : vector<16x64xf32> to vector<16x64xbf16>
    %219 = arith.truncf %206 : vector<16x64xf32> to vector<16x64xbf16>
    %c1_83 = arith.constant 1 : index
    %c0_84 = arith.constant 0 : index
    %c0_85 = arith.constant 0 : index
    %220 = vector.load %arg14[%c1_83, %c0_84, %c0_85] : memref<3x64x32xbf16, #tpu.memory_space<vmem>>, vector<1x64x32xbf16>
    %221 = vector.shape_cast %220 : vector<1x64x32xbf16> to vector<64x32xbf16>
    %cst_86 = arith.constant dense<0.000000e+00> : vector<16x32xf32>
    %222 = tpu.matmul %219, %221, %cst_86 {dimension_numbers = #tpu.dot_dimension_numbers<[1], [0], [0], [1], [0, 0, 1, 1], [], []>} : vector<16x64xbf16>, vector<64x32xbf16>, vector<16x32xf32> -> vector<16x32xf32>
    %c0_87 = arith.constant 0 : index
    %c0_88 = arith.constant 0 : index
    %c0_89 = arith.constant 0 : index
    %223 = vector.load %arg14[%c0_87, %c0_88, %c0_89] : memref<3x64x32xbf16, #tpu.memory_space<vmem>>, vector<1x64x32xbf16>
    %224 = vector.shape_cast %223 : vector<1x64x32xbf16> to vector<64x32xbf16>
    %cst_90 = arith.constant dense<0.000000e+00> : vector<16x32xf32>
    %225 = tpu.matmul %217, %224, %cst_90 {dimension_numbers = #tpu.dot_dimension_numbers<[1], [0], [0], [1], [0, 0, 1, 1], [], []>} : vector<16x64xbf16>, vector<64x32xbf16>, vector<16x32xf32> -> vector<16x32xf32>
    %226 = arith.addf %222, %225 : vector<16x32xf32>
    %c2_91 = arith.constant 2 : index
    %c0_92 = arith.constant 0 : index
    %c0_93 = arith.constant 0 : index
    %227 = vector.load %arg14[%c2_91, %c0_92, %c0_93] : memref<3x64x32xbf16, #tpu.memory_space<vmem>>, vector<1x64x32xbf16>
    %228 = vector.shape_cast %227 : vector<1x64x32xbf16> to vector<64x32xbf16>
    %cst_94 = arith.constant dense<0.000000e+00> : vector<16x32xf32>
    %229 = tpu.matmul %218, %228, %cst_94 {dimension_numbers = #tpu.dot_dimension_numbers<[1], [0], [0], [1], [0, 0, 1, 1], [], []>} : vector<16x64xbf16>, vector<64x32xbf16>, vector<16x32xf32> -> vector<16x32xf32>
    %230 = arith.addf %226, %229 : vector<16x32xf32>
    %c0_95 = arith.constant 0 : index
    %c0_96 = arith.constant 0 : index
    %231 = vector.load %arg15[%c0_95, %c0_96] : memref<1x32xf32, #tpu.memory_space<vmem>>, vector<1x32xf32>
    %232 = vector.broadcast %231 : vector<1x32xf32> to vector<16x32xf32>
    %233 = arith.addf %230, %232 : vector<16x32xf32>
    %cst_97 = arith.constant 0.000000e+00 : f32
    %234 = vector.broadcast %cst_97 : f32 to vector<16x32xf32>
    %235 = arith.maximumf %233, %234 : vector<16x32xf32>
    %236 = arith.addf %235, %140 : vector<16x32xf32>
    %c0_98 = arith.constant 0 : index
    %c0_99 = arith.constant 0 : index
    %237 = vector.load %arg16[%c0_98, %c0_99] : memref<1x32xf32, #tpu.memory_space<vmem>>, vector<1x32xf32>
    %c0_100 = arith.constant 0 : index
    %c0_101 = arith.constant 0 : index
    %238 = vector.load %arg17[%c0_100, %c0_101] : memref<1x32xf32, #tpu.memory_space<vmem>>, vector<1x32xf32>
    %cst_102 = arith.constant dense<0.000000e+00> : vector<16xf32>
    %239 = vector.multi_reduction <add>, %236, %cst_102 [1] : vector<16x32xf32> to vector<16xf32>
    %240 = vector.shape_cast %239 : vector<16xf32> to vector<16x1xf32>
    %cst_103 = arith.constant 3.200000e+01 : f32
    %241 = vector.broadcast %cst_103 : f32 to vector<16x1xf32>
    %242 = arith.divf %240, %241 : vector<16x1xf32>
    %243 = vector.broadcast %242 : vector<16x1xf32> to vector<16x32xf32>
    %244 = arith.subf %236, %243 : vector<16x32xf32>
    %245 = arith.mulf %244, %244 : vector<16x32xf32>
    %cst_104 = arith.constant dense<0.000000e+00> : vector<16xf32>
    %246 = vector.multi_reduction <add>, %245, %cst_104 [1] : vector<16x32xf32> to vector<16xf32>
    %247 = vector.shape_cast %246 : vector<16xf32> to vector<16x1xf32>
    %cst_105 = arith.constant 3.200000e+01 : f32
    %248 = vector.broadcast %cst_105 : f32 to vector<16x1xf32>
    %249 = arith.divf %247, %248 : vector<16x1xf32>
    %250 = vector.broadcast %242 : vector<16x1xf32> to vector<16x32xf32>
    %251 = arith.subf %236, %250 : vector<16x32xf32>
    %cst_106 = arith.constant 9.99999974E-6 : f32
    %252 = vector.broadcast %cst_106 : f32 to vector<16x1xf32>
    %253 = arith.addf %249, %252 : vector<16x1xf32>
    %254 = math.rsqrt %253 : vector<16x1xf32>
    %255 = vector.broadcast %254 : vector<16x1xf32> to vector<16x32xf32>
    %256 = arith.mulf %251, %255 : vector<16x32xf32>
    %257 = vector.broadcast %237 : vector<1x32xf32> to vector<16x32xf32>
    %258 = arith.mulf %256, %257 : vector<16x32xf32>
    %259 = vector.broadcast %238 : vector<1x32xf32> to vector<16x32xf32>
    %260 = arith.addf %258, %259 : vector<16x32xf32>
    %c0_107 = arith.constant 0 : index
    %c0_108 = arith.constant 0 : index
    %261 = vector.load %arg18[%c0_107, %c0_108] : memref<16x32xf32, #tpu.memory_space<vmem>>, vector<16x32xf32>
    tpu.vector_store %arg18[%c0_107, %c0_108], %260 {strides = array<i32>} : memref<16x32xf32, #tpu.memory_space<vmem>>, vector<16x32xf32>,
    return
  }
  func.func @transform_0(%arg0: i32) -> (i32, i32) {
    %c0_i32 = arith.constant 0 : i32
    %c0_i32_0 = arith.constant 0 : i32
    return %arg0, %c0_i32 : i32, i32
  }
  func.func @transform_1(%arg0: i32) -> (i32, i32) {
    %c0_i32 = arith.constant 0 : i32
    %c0_i32_0 = arith.constant 0 : i32
    %c0_i32_1 = arith.constant 0 : i32
    return %c0_i32, %c0_i32_0 : i32, i32
  }
  func.func @transform_2(%arg0: i32) -> (i32, i32) {
    %c0_i32 = arith.constant 0 : i32
    %c0_i32_0 = arith.constant 0 : i32
    %c0_i32_1 = arith.constant 0 : i32
    return %c0_i32, %c0_i32_0 : i32, i32
  }
  func.func @transform_3(%arg0: i32) -> (i32, i32) {
    %c0_i32 = arith.constant 0 : i32
    %c0_i32_0 = arith.constant 0 : i32
    %c0_i32_1 = arith.constant 0 : i32
    return %c0_i32, %c0_i32_0 : i32, i32
  }
  func.func @transform_4(%arg0: i32) -> (i32, i32) {
    %c0_i32 = arith.constant 0 : i32
    %c0_i32_0 = arith.constant 0 : i32
    %c0_i32_1 = arith.constant 0 : i32
    return %c0_i32, %c0_i32_0 : i32, i32
  }
  func.func @transform_5(%arg0: i32) -> (i32, i32) {
    %c0_i32 = arith.constant 0 : i32
    %c0_i32_0 = arith.constant 0 : i32
    %c0_i32_1 = arith.constant 0 : i32
    return %c0_i32, %c0_i32_0 : i32, i32
  }
  func.func @transform_6(%arg0: i32) -> (i32, i32) {
    %c0_i32 = arith.constant 0 : i32
    %c0_i32_0 = arith.constant 0 : i32
    %c0_i32_1 = arith.constant 0 : i32
    return %c0_i32, %c0_i32_0 : i32, i32
  }
  func.func @transform_7(%arg0: i32) -> (i32, i32) {
    %c0_i32 = arith.constant 0 : i32
    %c0_i32_0 = arith.constant 0 : i32
    %c0_i32_1 = arith.constant 0 : i32
    return %c0_i32, %c0_i32_0 : i32, i32
  }
  func.func @transform_8(%arg0: i32) -> (i32, i32) {
    %c0_i32 = arith.constant 0 : i32
    %c0_i32_0 = arith.constant 0 : i32
    %c0_i32_1 = arith.constant 0 : i32
    return %c0_i32, %c0_i32_0 : i32, i32
  }
  func.func @transform_9(%arg0: i32) -> (i32, i32) {
    %c0_i32 = arith.constant 0 : i32
    %c0_i32_0 = arith.constant 0 : i32
    %c0_i32_1 = arith.constant 0 : i32
    return %c0_i32, %c0_i32_0 : i32, i32
  }
  func.func @transform_10(%arg0: i32) -> (i32, i32) {
    %c0_i32 = arith.constant 0 : i32
    %c0_i32_0 = arith.constant 0 : i32
    %c0_i32_1 = arith.constant 0 : i32
    return %c0_i32, %c0_i32_0 : i32, i32
  }
  func.func @transform_11(%arg0: i32) -> (i32, i32, i32) {
    %c0_i32 = arith.constant 0 : i32
    %c0_i32_0 = arith.constant 0 : i32
    %c0_i32_1 = arith.constant 0 : i32
    %c0_i32_2 = arith.constant 0 : i32
    return %c0_i32, %c0_i32_0, %c0_i32_1 : i32, i32, i32
  }
  func.func @transform_12(%arg0: i32) -> (i32, i32) {
    %c0_i32 = arith.constant 0 : i32
    %c0_i32_0 = arith.constant 0 : i32
    %c0_i32_1 = arith.constant 0 : i32
    return %c0_i32, %c0_i32_0 : i32, i32
  }
  func.func @transform_13(%arg0: i32) -> (i32, i32, i32) {
    %c0_i32 = arith.constant 0 : i32
    %c0_i32_0 = arith.constant 0 : i32
    %c0_i32_1 = arith.constant 0 : i32
    %c0_i32_2 = arith.constant 0 : i32
    return %c0_i32, %c0_i32_0, %c0_i32_1 : i32, i32, i32
  }
  func.func @transform_14(%arg0: i32) -> (i32, i32) {
    %c0_i32 = arith.constant 0 : i32
    %c0_i32_0 = arith.constant 0 : i32
    %c0_i32_1 = arith.constant 0 : i32
    return %c0_i32, %c0_i32_0 : i32, i32
  }
  func.func @transform_15(%arg0: i32) -> (i32, i32) {
    %c0_i32 = arith.constant 0 : i32
    %c0_i32_0 = arith.constant 0 : i32
    %c0_i32_1 = arith.constant 0 : i32
    return %c0_i32, %c0_i32_0 : i32, i32
  }
  func.func @transform_16(%arg0: i32) -> (i32, i32) {
    %c0_i32 = arith.constant 0 : i32
    %c0_i32_0 = arith.constant 0 : i32
    %c0_i32_1 = arith.constant 0 : i32
    return %c0_i32, %c0_i32_0 : i32, i32
  }
  func.func @transform_17(%arg0: i32) -> (i32, i32) {
    %c0_i32 = arith.constant 0 : i32
    %c0_i32_0 = arith.constant 0 : i32
    return %arg0, %c0_i32 : i32, i32
  }
}

</mosaic_0001>

<llo_original>
// kernel: fft_block.1
$region0: #{fft_block.1}
  #allocation0 [shape = 'u32[]', space=smem, size = 0x4, offset = 0x4, fixed_abs, tag = 'smem constant byte address 0x4 - core index']
  #allocation1 [shape = 'u32[72,128]{1,0:T(1,128)}', space=vmem, size = 0x9000, scoped, tag = 'internal scratch']
  #allocation2 [shape = 'bf16[16,32]{1,0:T(8,128)(2,1)}', space=vmem, size = 0x1000, scoped, tag = 'scratch operand']
  %s0 = inlined_call_operand.vmem [shape: f32[32,32], index: 0, kind: input, shape index: {}]
  %s1 = inlined_call_operand.vmem [shape: bf16[32,32], index: 1, kind: input, shape index: {}]
  %s2 = inlined_call_operand.vmem [shape: bf16[32,32], index: 2, kind: input, shape index: {}]
  %s3 = inlined_call_operand.vmem [shape: bf16[32,32], index: 3, kind: input, shape index: {}]
  %s4 = inlined_call_operand.vmem [shape: f32[1,32], index: 4, kind: input, shape index: {}]
  %s5 = inlined_call_operand.vmem [shape: f32[1,32], index: 5, kind: input, shape index: {}]
  %s6 = inlined_call_operand.vmem [shape: f32[1,32], index: 6, kind: input, shape index: {}]
  %s7 = inlined_call_operand.vmem [shape: bf16[32,32], index: 7, kind: input, shape index: {}]
  %s8 = inlined_call_operand.vmem [shape: f32[1,32], index: 8, kind: input, shape index: {}]
  %s9 = inlined_call_operand.vmem [shape: f32[1,32], index: 9, kind: input, shape index: {}]
  %s10 = inlined_call_operand.vmem [shape: f32[1,32], index: 10, kind: input, shape index: {}]
  %s11 = inlined_call_operand.vmem [shape: bf16[3,32,64], index: 11, kind: input, shape index: {}]
  %s12 = inlined_call_operand.vmem [shape: f32[1,64], index: 12, kind: input, shape index: {}]
  %s13 = inlined_call_operand.vmem [shape: bf16[3,64,32], index: 13, kind: input, shape index: {}]
  %s14 = inlined_call_operand.vmem [shape: f32[1,32], index: 14, kind: input, shape index: {}]
  %s15 = inlined_call_operand.vmem [shape: f32[1,32], index: 15, kind: input, shape index: {}]
  %s16 = inlined_call_operand.vmem [shape: f32[1,32], index: 16, kind: input, shape index: {}]
  %s17 = inlined_call_operand.hbm [shape: f32[32,32], index: 17, kind: output, shape index: {}]
  %s18 = sld [smem:[#allocation0]]
  $region101: #{fft_block.1} parent=0
    _
  %s20 = ssub.s32 1, %s18
  %s21 = scalar_select 0, %s20, %s18
  $region1: #{fft_block.1} parent=0
    #allocation3 [shape = 'u8[16384]{0}', space=vmem, size = 0x4000, scoped, tag = 'output window, operand 0']
    #allocation4 [shape = 's32[2]{0}', space=sflag, size = 0x8, scoped, tag = 'scoped memory for fft_block.1']
    %22 = vsyncpa [#allocation4], 0
    %s23 = scalar_lea.sflag [#allocation4], 1
    %24 = vsyncpa %s23, 0
    loop: start=0, step=1, limit=4
    $region2: #{fft_block.1} parent=1 // loop_pre_header
      _
    $region3: #{fft_block.1} parent=1 // loop_header
      %s26 = sphi 0, %s30
      %p27 = scmp.ge.s32.totalorder %s26, 4
      %s36 = sphi 0, %s38
      %s39 = sphi 0, %s36
      %s40 = sphi 0, %s39
      %s56 = sphi 0, %s40
      %s60 = sphi 0, %s60
      %s62 = sphi 0, %s60
      %s63 = sphi 0, %s62
      %s77 = sphi 0, %s63
      %s81 = sphi 0, %s81
      %s83 = sphi 0, %s81
      %s84 = sphi 0, %s83
      %s98 = sphi 0, %s84
      %s102 = sphi 0, %s102
      %s104 = sphi 0, %s102
      %s105 = sphi 0, %s104
      %s119 = sphi 0, %s105
      %s123 = sphi 0, %s123
      %s125 = sphi 0, %s123
      %s126 = sphi 0, %s125
      %s140 = sphi 0, %s126
      %s144 = sphi 0, %s144
      %s146 = sphi 0, %s144
      %s147 = sphi 0, %s146
      %s161 = sphi 0, %s147
      %s165 = sphi 0, %s165
      %s167 = sphi 0, %s165
      %s168 = sphi 0, %s167
      %s182 = sphi 0, %s168
      %s186 = sphi 0, %s186
      %s188 = sphi 0, %s186
      %s189 = sphi 0, %s188
      %s203 = sphi 0, %s189
      %s207 = sphi 0, %s207
      %s209 = sphi 0, %s207
      %s210 = sphi 0, %s209
      %s224 = sphi 0, %s210
      %s228 = sphi 0, %s228
      %s230 = sphi 0, %s228
      %s231 = sphi 0, %s230
      %s245 = sphi 0, %s231
      %s249 = sphi 0, %s249
      %s251 = sphi 0, %s249
      %s252 = sphi 0, %s251
      %s266 = sphi 0, %s252
      %s270 = sphi 0, %s270
      %s272 = sphi 0, %s270
      %s273 = sphi 0, %s272
      %s287 = sphi 0, %s273
      %s291 = sphi 0, %s291
      %s293 = sphi 0, %s291
      %s294 = sphi 0, %s293
      %s308 = sphi 0, %s294
      %s312 = sphi 0, %s312
      %s314 = sphi 0, %s312
      %s315 = sphi 0, %s314
      %s329 = sphi 0, %s315
      %s333 = sphi 0, %s333
      %s335 = sphi 0, %s333
      %s336 = sphi 0, %s335
      %s350 = sphi 0, %s336
      %s354 = sphi 0, %s354
      %s356 = sphi 0, %s354
      %s357 = sphi 0, %s356
      %s371 = sphi 0, %s357
      %s375 = sphi 0, %s375
      %s377 = sphi 0, %s375
      %s378 = sphi 0, %s377
      %s392 = sphi 0, %s378
      %s398 = sphi 0, %s400
      %s401 = sphi 0, %s398
      %s402 = sphi 0, %s401
      %s418 = sphi 0, %s402
    $region4: #{fft_block.1} parent=1 // loop_header_branch
      %29 = sbr.rel (%p27) target = $region8
    $region5: #{fft_block.1} parent=1 // loop_body
      %s31 = ssub.s32 %s26, 1
      %s32 = ssub.s32 %s26, 2
      %s33 = sadd.s32 %s26, 1
      %s34 = ssub.s32 %s26, %s33
      %p35 = scmp.eq.s32.totalorder %s34, 0
      %s37 = sadd.s32 %s36, 1
      %s38 = scalar_select %p35, %s36, %s37
      %p41 = pneg %p35
      %p42 = scmp.eq.s32.totalorder %s26, 1
      %p43 = por %p41, %p42
      %p44 = scmp.ne.s32.totalorder %s36, %s39
      %p45 = scmp.eq.s32.totalorder %s26, 0
      %p46 = por %p44, %p45
      %p47 = scmp.ne.s32.totalorder %s36, %s39
      %p48 = scmp.eq.s32.totalorder %s31, 1
      %p49 = por %p47, %p48
      %p50 = scmp.ne.s32.totalorder %s39, %s40
      %p51 = scmp.eq.s32.totalorder %s31, 0
      %p52 = por %p50, %p51
      %p53 = scmp.ne.s32.totalorder %s39, %s40
      %p54 = scmp.eq.s32.totalorder %s32, 1
      %p55 = por %p53, %p54
      %p57 = scmp.ne.s32.totalorder %s40, %s56
      %p58 = scmp.eq.s32.totalorder %s32, 0
      %p59 = por %p57, %p58
      %s61 = sadd.s32 %s60, 1
      %p64 = scmp.eq.s32.totalorder %s26, 1
      %p65 = scmp.ne.s32.totalorder %s60, %s62
      %p66 = scmp.eq.s32.totalorder %s26, 0
      %p67 = por %p65, %p66
      %p68 = scmp.ne.s32.totalorder %s60, %s62
      %p69 = scmp.eq.s32.totalorder %s31, 1
      %p70 = por %p68, %p69
      %p71 = scmp.ne.s32.totalorder %s62, %s63
      %p72 = scmp.eq.s32.totalorder %s31, 0
      %p73 = por %p71, %p72
      %p74 = scmp.ne.s32.totalorder %s62, %s63
      %p75 = scmp.eq.s32.totalorder %s32, 1
      %p76 = por %p74, %p75
      %p78 = scmp.ne.s32.totalorder %s63, %s77
      %p79 = scmp.eq.s32.totalorder %s32, 0
      %p80 = por %p78, %p79
      %s82 = sadd.s32 %s81, 1
      %p85 = scmp.eq.s32.totalorder %s26, 1
      %p86 = scmp.ne.s32.totalorder %s81, %s83
      %p87 = scmp.eq.s32.totalorder %s26, 0
      %p88 = por %p86, %p87
      %p89 = scmp.ne.s32.totalorder %s81, %s83
      %p90 = scmp.eq.s32.totalorder %s31, 1
      %p91 = por %p89, %p90
      %p92 = scmp.ne.s32.totalorder %s83, %s84
      %p93 = scmp.eq.s32.totalorder %s31, 0
      %p94 = por %p92, %p93
      %p95 = scmp.ne.s32.totalorder %s83, %s84
      %p96 = scmp.eq.s32.totalorder %s32, 1
      %p97 = por %p95, %p96
      %p99 = scmp.ne.s32.totalorder %s84, %s98
      %p100 = scmp.eq.s32.totalorder %s32, 0
      %p101 = por %p99, %p100
      %s103 = sadd.s32 %s102, 1
      %p106 = scmp.eq.s32.totalorder %s26, 1
      %p107 = scmp.ne.s32.totalorder %s102, %s104
      %p108 = scmp.eq.s32.totalorder %s26, 0
      %p109 = por %p107, %p108
      %p110 = scmp.ne.s32.totalorder %s102, %s104
      %p111 = scmp.eq.s32.totalorder %s31, 1
      %p112 = por %p110, %p111
      %p113 = scmp.ne.s32.totalorder %s104, %s105
      %p114 = scmp.eq.s32.totalorder %s31, 0
      %p115 = por %p113, %p114
      %p116 = scmp.ne.s32.totalorder %s104, %s105
      %p117 = scmp.eq.s32.totalorder %s32, 1
      %p118 = por %p116, %p117
      %p120 = scmp.ne.s32.totalorder %s105, %s119
      %p121 = scmp.eq.s32.totalorder %s32, 0
      %p122 = por %p120, %p121
      %s124 = sadd.s32 %s123, 1
      %p127 = scmp.eq.s32.totalorder %s26, 1
      %p128 = scmp.ne.s32.totalorder %s123, %s125
      %p129 = scmp.eq.s32.totalorder %s26, 0
      %p130 = por %p128, %p129
      %p131 = scmp.ne.s32.totalorder %s123, %s125
      %p132 = scmp.eq.s32.totalorder %s31, 1
      %p133 = por %p131, %p132
      %p134 = scmp.ne.s32.totalorder %s125, %s126
      %p135 = scmp.eq.s32.totalorder %s31, 0
      %p136 = por %p134, %p135
      %p137 = scmp.ne.s32.totalorder %s125, %s126
      %p138 = scmp.eq.s32.totalorder %s32, 1
      %p139 = por %p137, %p138
      %p141 = scmp.ne.s32.totalorder %s126, %s140
      %p142 = scmp.eq.s32.totalorder %s32, 0
      %p143 = por %p141, %p142
      %s145 = sadd.s32 %s144, 1
      %p148 = scmp.eq.s32.totalorder %s26, 1
      %p149 = scmp.ne.s32.totalorder %s144, %s146
      %p150 = scmp.eq.s32.totalorder %s26, 0
      %p151 = por %p149, %p150
      %p152 = scmp.ne.s32.totalorder %s144, %s146
      %p153 = scmp.eq.s32.totalorder %s31, 1
      %p154 = por %p152, %p153
      %p155 = scmp.ne.s32.totalorder %s146, %s147
      %p156 = scmp.eq.s32.totalorder %s31, 0
      %p157 = por %p155, %p156
      %p158 = scmp.ne.s32.totalorder %s146, %s147
      %p159 = scmp.eq.s32.totalorder %s32, 1
      %p160 = por %p158, %p159
      %p162 = scmp.ne.s32.totalorder %s147, %s161
      %p163 = scmp.eq.s32.totalorder %s32, 0
      %p164 = por %p162, %p163
      %s166 = sadd.s32 %s165, 1
      %p169 = scmp.eq.s32.totalorder %s26, 1
      %p170 = scmp.ne.s32.totalorder %s165, %s167
      %p171 = scmp.eq.s32.totalorder %s26, 0
      %p172 = por %p170, %p171
      %p173 = scmp.ne.s32.totalorder %s165, %s167
      %p174 = scmp.eq.s32.totalorder %s31, 1
      %p175 = por %p173, %p174
      %p176 = scmp.ne.s32.totalorder %s167, %s168
      %p177 = scmp.eq.s32.totalorder %s31, 0
      %p178 = por %p176, %p177
      %p179 = scmp.ne.s32.totalorder %s167, %s168
      %p180 = scmp.eq.s32.totalorder %s32, 1
      %p181 = por %p179, %p180
      %p183 = scmp.ne.s32.totalorder %s168, %s182
      %p184 = scmp.eq.s32.totalorder %s32, 0
      %p185 = por %p183, %p184
      %s187 = sadd.s32 %s186, 1
      %p190 = scmp.eq.s32.totalorder %s26, 1
      %p191 = scmp.ne.s32.totalorder %s186, %s188
      %p192 = scmp.eq.s32.totalorder %s26, 0
      %p193 = por %p191, %p192
      %p194 = scmp.ne.s32.totalorder %s186, %s188
      %p195 = scmp.eq.s32.totalorder %s31, 1
      %p196 = por %p194, %p195
      %p197 = scmp.ne.s32.totalorder %s188, %s189
      %p198 = scmp.eq.s32.totalorder %s31, 0
      %p199 = por %p197, %p198
      %p200 = scmp.ne.s32.totalorder %s188, %s189
      %p201 = scmp.eq.s32.totalorder %s32, 1
      %p202 = por %p200, %p201
      %p204 = scmp.ne.s32.totalorder %s189, %s203
      %p205 = scmp.eq.s32.totalorder %s32, 0
      %p206 = por %p204, %p205
      %s208 = sadd.s32 %s207, 1
      %p211 = scmp.eq.s32.totalorder %s26, 1
      %p212 = scmp.ne.s32.totalorder %s207, %s209
      %p213 = scmp.eq.s32.totalorder %s26, 0
      %p214 = por %p212, %p213
      %p215 = scmp.ne.s32.totalorder %s207, %s209
      %p216 = scmp.eq.s32.totalorder %s31, 1
      %p217 = por %p215, %p216
      %p218 = scmp.ne.s32.totalorder %s209, %s210
      %p219 = scmp.eq.s32.totalorder %s31, 0
      %p220 = por %p218, %p219
      %p221 = scmp.ne.s32.totalorder %s209, %s210
      %p222 = scmp.eq.s32.totalorder %s32, 1
      %p223 = por %p221, %p222
      %p225 = scmp.ne.s32.totalorder %s210, %s224
      %p226 = scmp.eq.s32.totalorder %s32, 0
      %p227 = por %p225, %p226
      %s229 = sadd.s32 %s228, 1
      %p232 = scmp.eq.s32.totalorder %s26, 1
      %p233 = scmp.ne.s32.totalorder %s228, %s230
      %p234 = scmp.eq.s32.totalorder %s26, 0
      %p235 = por %p233, %p234
      %p236 = scmp.ne.s32.totalorder %s228, %s230
      %p237 = scmp.eq.s32.totalorder %s31, 1
      %p238 = por %p236, %p237
      %p239 = scmp.ne.s32.totalorder %s230, %s231
      %p240 = scmp.eq.s32.totalorder %s31, 0
      %p241 = por %p239, %p240
      %p242 = scmp.ne.s32.totalorder %s230, %s231
      %p243 = scmp.eq.s32.totalorder %s32, 1
      %p244 = por %p242, %p243
      %p246 = scmp.ne.s32.totalorder %s231, %s245
      %p247 = scmp.eq.s32.totalorder %s32, 0
      %p248 = por %p246, %p247
      %s250 = sadd.s32 %s249, 1
      %p253 = scmp.eq.s32.totalorder %s26, 1
      %p254 = scmp.ne.s32.totalorder %s249, %s251
      %p255 = scmp.eq.s32.totalorder %s26, 0
      %p256 = por %p254, %p255
      %p257 = scmp.ne.s32.totalorder %s249, %s251
      %p258 = scmp.eq.s32.totalorder %s31, 1
      %p259 = por %p257, %p258
      %p260 = scmp.ne.s32.totalorder %s251, %s252
      %p261 = scmp.eq.s32.totalorder %s31, 0
      %p262 = por %p260, %p261
      %p263 = scmp.ne.s32.totalorder %s251, %s252
      %p264 = scmp.eq.s32.totalorder %s32, 1
      %p265 = por %p263, %p264
      %p267 = scmp.ne.s32.totalorder %s252, %s266
      %p268 = scmp.eq.s32.totalorder %s32, 0
      %p269 = por %p267, %p268
      %s271 = sadd.s32 %s270, 1
      %p274 = scmp.eq.s32.totalorder %s26, 1
      %p275 = scmp.ne.s32.totalorder %s270, %s272
      %p276 = scmp.eq.s32.totalorder %s26, 0
      %p277 = por %p275, %p276
      %p278 = scmp.ne.s32.totalorder %s270, %s272
      %p279 = scmp.eq.s32.totalorder %s31, 1
      %p280 = por %p278, %p279
      %p281 = scmp.ne.s32.totalorder %s272, %s273
      %p282 = scmp.eq.s32.totalorder %s31, 0
      %p283 = por %p281, %p282
      %p284 = scmp.ne.s32.totalorder %s272, %s273
      %p285 = scmp.eq.s32.totalorder %s32, 1
      %p286 = por %p284, %p285
      %p288 = scmp.ne.s32.totalorder %s273, %s287
      %p289 = scmp.eq.s32.totalorder %s32, 0
      %p290 = por %p288, %p289
      %s292 = sadd.s32 %s291, 1
      %p295 = scmp.eq.s32.totalorder %s26, 1
      %p296 = scmp.ne.s32.totalorder %s291, %s293
      %p297 = scmp.eq.s32.totalorder %s26, 0
      %p298 = por %p296, %p297
      %p299 = scmp.ne.s32.totalorder %s291, %s293
      %p300 = scmp.eq.s32.totalorder %s31, 1
      %p301 = por %p299, %p300
      %p302 = scmp.ne.s32.totalorder %s293, %s294
      %p303 = scmp.eq.s32.totalorder %s31, 0
      %p304 = por %p302, %p303
      %p305 = scmp.ne.s32.totalorder %s293, %s294
      %p306 = scmp.eq.s32.totalorder %s32, 1
      %p307 = por %p305, %p306
      %p309 = scmp.ne.s32.totalorder %s294, %s308
      %p310 = scmp.eq.s32.totalorder %s32, 0
      %p311 = por %p309, %p310
      %s313 = sadd.s32 %s312, 1
      %p316 = scmp.eq.s32.totalorder %s26, 1
      %p317 = scmp.ne.s32.totalorder %s312, %s314
      %p318 = scmp.eq.s32.totalorder %s26, 0
      %p319 = por %p317, %p318
      %p320 = scmp.ne.s32.totalorder %s312, %s314
      %p321 = scmp.eq.s32.totalorder %s31, 1
      %p322 = por %p320, %p321
      %p323 = scmp.ne.s32.totalorder %s314, %s315
      %p324 = scmp.eq.s32.totalorder %s31, 0
      %p325 = por %p323, %p324
      %p326 = scmp.ne.s32.totalorder %s314, %s315
      %p327 = scmp.eq.s32.totalorder %s32, 1
      %p328 = por %p326, %p327
      %p330 = scmp.ne.s32.totalorder %s315, %s329
      %p331 = scmp.eq.s32.totalorder %s32, 0
      %p332 = por %p330, %p331
      %s334 = sadd.s32 %s333, 1
      %p337 = scmp.eq.s32.totalorder %s26, 1
      %p338 = scmp.ne.s32.totalorder %s333, %s335
      %p339 = scmp.eq.s32.totalorder %s26, 0
      %p340 = por %p338, %p339
      %p341 = scmp.ne.s32.totalorder %s333, %s335
      %p342 = scmp.eq.s32.totalorder %s31, 1
      %p343 = por %p341, %p342
      %p344 = scmp.ne.s32.totalorder %s335, %s336
      %p345 = scmp.eq.s32.totalorder %s31, 0
      %p346 = por %p344, %p345
      %p347 = scmp.ne.s32.totalorder %s335, %s336
      %p348 = scmp.eq.s32.totalorder %s32, 1
      %p349 = por %p347, %p348
      %p351 = scmp.ne.s32.totalorder %s336, %s350
      %p352 = scmp.eq.s32.totalorder %s32, 0
      %p353 = por %p351, %p352
      %s355 = sadd.s32 %s354, 1
      %p358 = scmp.eq.s32.totalorder %s26, 1
      %p359 = scmp.ne.s32.totalorder %s354, %s356
      %p360 = scmp.eq.s32.totalorder %s26, 0
      %p361 = por %p359, %p360
      %p362 = scmp.ne.s32.totalorder %s354, %s356
      %p363 = scmp.eq.s32.totalorder %s31, 1
      %p364 = por %p362, %p363
      %p365 = scmp.ne.s32.totalorder %s356, %s357
      %p366 = scmp.eq.s32.totalorder %s31, 0
      %p367 = por %p365, %p366
      %p368 = scmp.ne.s32.totalorder %s356, %s357
      %p369 = scmp.eq.s32.totalorder %s32, 1
      %p370 = por %p368, %p369
      %p372 = scmp.ne.s32.totalorder %s357, %s371
      %p373 = scmp.eq.s32.totalorder %s32, 0
      %p374 = por %p372, %p373
      %s376 = sadd.s32 %s375, 1
      %p379 = scmp.eq.s32.totalorder %s26, 1
      %p380 = scmp.ne.s32.totalorder %s375, %s377
      %p381 = scmp.eq.s32.totalorder %s26, 0
      %p382 = por %p380, %p381
      %p383 = scmp.ne.s32.totalorder %s375, %s377
      %p384 = scmp.eq.s32.totalorder %s31, 1
      %p385 = por %p383, %p384
      %p386 = scmp.ne.s32.totalorder %s377, %s378
      %p387 = scmp.eq.s32.totalorder %s31, 0
      %p388 = por %p386, %p387
      %p389 = scmp.ne.s32.totalorder %s377, %s378
      %p390 = scmp.eq.s32.totalorder %s32, 1
      %p391 = por %p389, %p390
      %p393 = scmp.ne.s32.totalorder %s378, %s392
      %p394 = scmp.eq.s32.totalorder %s32, 0
      %p395 = por %p393, %p394
      %s396 = ssub.s32 %s26, %s33
      %p397 = scmp.eq.s32.totalorder %s396, 0
      %s399 = sadd.s32 %s398, 1
      %s400 = scalar_select %p397, %s398, %s399
      %p403 = pneg %p397
      %p404 = scmp.eq.s32.totalorder %s26, 1
      %p405 = por %p403, %p404
      %p406 = scmp.ne.s32.totalorder %s398, %s401
      %p407 = scmp.eq.s32.totalorder %s26, 0
      %p408 = por %p406, %p407
      %p409 = scmp.ne.s32.totalorder %s398, %s401
      %p410 = scmp.eq.s32.totalorder %s31, 1
      %p411 = por %p409, %p410
      %p412 = scmp.ne.s32.totalorder %s401, %s402
      %p413 = scmp.eq.s32.totalorder %s31, 0
      %p414 = por %p412, %p413
      %p415 = scmp.ne.s32.totalorder %s401, %s402
      %p416 = scmp.eq.s32.totalorder %s32, 1
      %p417 = por %p415, %p416
      %p419 = scmp.ne.s32.totalorder %s402, %s418
      %p420 = scmp.eq.s32.totalorder %s32, 0
      %p421 = por %p419, %p420
      %p422 = scmp.le.s32.totalorder 1, %s26
      %p423 = scmp.lt.s32.totalorder %s26, 3
      %p424 = pnand %p422, %p423
      %p425 = pneg %p424
      // Predicated region
      $region9: #{fft_block.1} parent=5 // pred_check
        _
      $region10: #{fft_block.1} parent=5 // pred_check_branch
        %427 = sbr.rel (%p424) target = $region12
      $region11: #{fft_block.1} parent=5 // pred_region
        %s428 = ssub.s32 %s26, 1
        // Predicated region
        $region13: #{fft_block.1} parent=11 // pred_check
          %p429 = pneg %p73
        $region14: #{fft_block.1} parent=11 // pred_check_branch
          %431 = sbr.rel (%p429) target = $region16
        $region15: #{fft_block.1} parent=11 // pred_region
          _
        $region16: #{fft_block.1} parent=11 // pred_fallthru
          _
        // Predicated region
        $region17: #{fft_block.1} parent=11 // pred_check
          %p432 = pneg %p94
        $region18: #{fft_block.1} parent=11 // pred_check_branch
          %434 = sbr.rel (%p432) target = $region20
        $region19: #{fft_block.1} parent=11 // pred_region
          _
        $region20: #{fft_block.1} parent=11 // pred_fallthru
          _
        // Predicated region
        $region21: #{fft_block.1} parent=11 // pred_check
          %p435 = pneg %p115
        $region22: #{fft_block.1} parent=11 // pred_check_branch
          %437 = sbr.rel (%p435) target = $region24
        $region23: #{fft_block.1} parent=11 // pred_region
          _
        $region24: #{fft_block.1} parent=11 // pred_fallthru
          _
        // Predicated region
        $region25: #{fft_block.1} parent=11 // pred_check
          %p438 = pneg %p136
        $region26: #{fft_block.1} parent=11 // pred_check_branch
          %440 = sbr.rel (%p438) target = $region28
        $region27: #{fft_block.1} parent=11 // pred_region
          _
        $region28: #{fft_block.1} parent=11 // pred_fallthru
          _
        // Predicated region
        $region29: #{fft_block.1} parent=11 // pred_check
          %p441 = pneg %p157
        $region30: #{fft_block.1} parent=11 // pred_check_branch
          %443 = sbr.rel (%p441) target = $region32
        $region31: #{fft_block.1} parent=11 // pred_region
          _
        $region32: #{fft_block.1} parent=11 // pred_fallthru
          _
        // Predicated region
        $region33: #{fft_block.1} parent=11 // pred_check
          %p444 = pneg %p178
        $region34: #{fft_block.1} parent=11 // pred_check_branch
          %446 = sbr.rel (%p444) target = $region36
        $region35: #{fft_block.1} parent=11 // pred_region
          _
        $region36: #{fft_block.1} parent=11 // pred_fallthru
          _
        // Predicated region
        $region37: #{fft_block.1} parent=11 // pred_check
          %p447 = pneg %p199
        $region38: #{fft_block.1} parent=11 // pred_check_branch
          %449 = sbr.rel (%p447) target = $region40
        $region39: #{fft_block.1} parent=11 // pred_region
          _
        $region40: #{fft_block.1} parent=11 // pred_fallthru
          _
        // Predicated region
        $region41: #{fft_block.1} parent=11 // pred_check
          %p450 = pneg %p220
        $region42: #{fft_block.1} parent=11 // pred_check_branch
          %452 = sbr.rel (%p450) target = $region44
        $region43: #{fft_block.1} parent=11 // pred_region
          _
        $region44: #{fft_block.1} parent=11 // pred_fallthru
          _
        // Predicated region
        $region45: #{fft_block.1} parent=11 // pred_check
          %p453 = pneg %p241
        $region46: #{fft_block.1} parent=11 // pred_check_branch
          %455 = sbr.rel (%p453) target = $region48
        $region47: #{fft_block.1} parent=11 // pred_region
          _
        $region48: #{fft_block.1} parent=11 // pred_fallthru
          _
        // Predicated region
        $region49: #{fft_block.1} parent=11 // pred_check
          %p456 = pneg %p262
        $region50: #{fft_block.1} parent=11 // pred_check_branch
          %458 = sbr.rel (%p456) target = $region52
        $region51: #{fft_block.1} parent=11 // pred_region
          _
        $region52: #{fft_block.1} parent=11 // pred_fallthru
          _
        // Predicated region
        $region53: #{fft_block.1} parent=11 // pred_check
          %p459 = pneg %p283
        $region54: #{fft_block.1} parent=11 // pred_check_branch
          %461 = sbr.rel (%p459) target = $region56
        $region55: #{fft_block.1} parent=11 // pred_region
          _
        $region56: #{fft_block.1} parent=11 // pred_fallthru
          _
        // Predicated region
        $region57: #{fft_block.1} parent=11 // pred_check
          %p462 = pneg %p304
        $region58: #{fft_block.1} parent=11 // pred_check_branch
          %464 = sbr.rel (%p462) target = $region60
        $region59: #{fft_block.1} parent=11 // pred_region
          _
        $region60: #{fft_block.1} parent=11 // pred_fallthru
          _
        // Predicated region
        $region61: #{fft_block.1} parent=11 // pred_check
          %p465 = pneg %p325
        $region62: #{fft_block.1} parent=11 // pred_check_branch
          %467 = sbr.rel (%p465) target = $region64
        $region63: #{fft_block.1} parent=11 // pred_region
          _
        $region64: #{fft_block.1} parent=11 // pred_fallthru
          _
        // Predicated region
        $region65: #{fft_block.1} parent=11 // pred_check
          %p468 = pneg %p346
        $region66: #{fft_block.1} parent=11 // pred_check_branch
          %470 = sbr.rel (%p468) target = $region68
        $region67: #{fft_block.1} parent=11 // pred_region
          _
        $region68: #{fft_block.1} parent=11 // pred_fallthru
          _
        // Predicated region
        $region69: #{fft_block.1} parent=11 // pred_check
          %p471 = pneg %p367
        $region70: #{fft_block.1} parent=11 // pred_check_branch
          %473 = sbr.rel (%p471) target = $region72
        $region71: #{fft_block.1} parent=11 // pred_region
          _
        $region72: #{fft_block.1} parent=11 // pred_fallthru
          _
        // Predicated region
        $region73: #{fft_block.1} parent=11 // pred_check
          %p474 = pneg %p388
        $region74: #{fft_block.1} parent=11 // pred_check_branch
          %476 = sbr.rel (%p474) target = $region76
        $region75: #{fft_block.1} parent=11 // pred_region
          _
        $region76: #{fft_block.1} parent=11 // pred_fallthru
          _
      $region12: #{fft_block.1} parent=5 // pred_fallthru
        _
      %p477 = scmp.lt.s32.totalorder %s26, 2
      // Predicated region
      $region77: #{fft_block.1} parent=5 // pred_check
        %p478 = pneg %p477
      $region78: #{fft_block.1} parent=5 // pred_check_branch
        %480 = sbr.rel (%p478) target = $region80
      $region79: #{fft_block.1} parent=5 // pred_region
        // Predicated region
        $region81: #{fft_block.1} parent=79 // pred_check
          %p481 = pneg %p46
        $region82: #{fft_block.1} parent=79 // pred_check_branch
          %483 = sbr.rel (%p481) target = $region84
        $region83: #{fft_block.1} parent=79 // pred_region
          %s484 = smul.u32 2, %s26
          %p485 = scmp.lt.s32.totalorder %s484, 3
          %s486 = scalar_select %p485, %s484, 3
          %s487 = smul.addr %s486, 8
          %s488 = scalar_lea.vmem %s0, %s487
          %s489 = smul.u32 2, %s26
        $region84: #{fft_block.1} parent=79 // pred_fallthru
          _
      $region80: #{fft_block.1} parent=5 // pred_fallthru
        _
      %p490 = scmp.le.s32.totalorder 1, %s26
      %p491 = scmp.lt.s32.totalorder %s26, 3
      %p492 = pnand %p490, %p491
      %p493 = pneg %p492
      // Predicated region
      $region85: #{fft_block.1} parent=5 // pred_check
        _
      $region86: #{fft_block.1} parent=5 // pred_check_branch
        %495 = sbr.rel (%p492) target = $region88
      $region87: #{fft_block.1} parent=5 // pred_region
        %s496 = ssub.s32 %s26, 1
        %s497 = smul.u32 2, %s31
        %p498 = scmp.lt.s32.totalorder %s497, 3
        %s499 = scalar_select %p498, %s497, 3
        %s500 = smul.addr %s499, 8
        %s501 = scalar_lea.vmem %s0, %s500
        %p502 = pneg %p52
        %p503 = pneg %p49
        %p504 = pneg %p73
        %p505 = pneg %p70
        %p506 = pneg %p94
        %p507 = pneg %p91
        %p508 = pneg %p115
        %p509 = pneg %p112
        %p510 = pneg %p136
        %p511 = pneg %p133
        %p512 = pneg %p157
        %p513 = pneg %p154
        %p514 = pneg %p178
        %p515 = pneg %p175
        %p516 = pneg %p199
        %p517 = pneg %p196
        %p518 = pneg %p220
        %p519 = pneg %p217
        %p520 = pneg %p241
        %p521 = pneg %p238
        %p522 = pneg %p262
        %p523 = pneg %p259
        %p524 = pneg %p283
        %p525 = pneg %p280
        %p526 = pneg %p304
        %p527 = pneg %p301
        %p528 = pneg %p325
        %p529 = pneg %p322
        %p530 = pneg %p346
        %p531 = pneg %p343
        %p532 = pneg %p367
        %p533 = pneg %p364
        %p534 = pneg %p388
        %p535 = pneg %p385
        %p536 = pneg %p414
        %p537 = pneg %p411
        %s538 = sand.u32 %s401, 1
        %s539 = scalar_lea.sflag [#allocation4], %s538
        %s540 = sand.u32 %s401, 1
        %s541 = smul.addr %s540, 16
        %s542 = scalar_lea.vmem [#allocation3], %s541
        %s543 = smul.u32 2, %s31
        %p544 = scmp.lt.s32.totalorder %s543, 3
        %s545 = scalar_select %p544, %s543, 3
        %s546 = smul.addr %s545, 8
        %s547 = scalar_lea.vmem %s0, %s546
        %s548 = smul.u32 2, %s31
        %s549 = smul.u32 2, %s31
        %v551 = vld [vmem:[%s547] sm:$0xff]
        %v552 = vld [vmem:[%s547 + $0x8] sm:$0xff]
        %v553 = vpack.c.bf16 %v552, %v551
        %v554 = vld [vmem:[%s1] sm:$0xf]
        %v555 = vld [vmem:[%s1 + $0x4] sm:$0xf]
        %v556 = vld [vmem:[%s1 + $0x8] sm:$0xf]
        %v557 = vld [vmem:[%s1 + $0xc] sm:$0xf]
        %v558 = vld [vmem:[%s4] sm:$0x1]
        %v560 = vperm.slane %v558, 0
        %v566 = vunpack.c.l.b16 %v554
        %v567 = vunpack.c.l.b16 %v555
        %v568 = vunpack.c.l.b16 %v556
        %v569 = vunpack.c.l.b16 %v557
        %v570 = vpack.c.b16 %v567, %v566
        %v571 = vpack.c.b16 %v569, %v568
        %vm574 = vcmask 261120
        %v576 = vsel %vm574, %v553, 0
        %578 = vmatpush.bf16.msra.mxu0 0
        %579 = vmatpush.bf16.msra.mxu0 0
        %580 = vmatpush.bf16.msra.mxu0 0
        %581 = vmatpush.bf16.msra.mxu0 0
        %582 = vmatpush.bf16.msra.mxu0 0
        %583 = vmatpush.bf16.msra.mxu0 0
        %584 = vmatpush.bf16.msra.mxu0 %v571
        %585 = vmatpush.bf16.msra.mxu0 %v570
        %586 = vmatmul.bf16.gmra.mxu0 %v576
        %v587 = vpop.f32.mrf.mxu0
        %v588 = vadd.f32 %v560, %v587
        %v589 = vpop.f32.mrf.mxu0
        %v590 = vadd.f32 %v560, %v589
        %591 = vdwg.mxu0
        %v592 = vld [vmem:[%s2] sm:$0xf]
        %v593 = vld [vmem:[%s2 + $0x4] sm:$0xf]
        %v594 = vld [vmem:[%s2 + $0x8] sm:$0xf]
        %v595 = vld [vmem:[%s2 + $0xc] sm:$0xf]
        %v596 = vld [vmem:[%s5] sm:$0x1]
        %v598 = vperm.slane %v596, 0
        %v604 = vunpack.c.l.b16 %v592
        %v605 = vunpack.c.l.b16 %v593
        %v606 = vunpack.c.l.b16 %v594
        %v607 = vunpack.c.l.b16 %v595
        %v608 = vpack.c.b16 %v605, %v604
        %v609 = vpack.c.b16 %v607, %v606
        %612 = vmatpush.bf16.msra.mxu0 0
        %613 = vmatpush.bf16.msra.mxu0 0
        %614 = vmatpush.bf16.msra.mxu0 0
        %615 = vmatpush.bf16.msra.mxu0 0
        %616 = vmatpush.bf16.msra.mxu0 0
        %617 = vmatpush.bf16.msra.mxu0 0
        %618 = vmatpush.bf16.msra.mxu0 %v609
        %619 = vmatpush.bf16.msra.mxu0 %v608
        %620 = vmatmul.bf16.gmra.mxu0 %v576
        %v621 = vpop.f32.mrf.mxu0
        %v622 = vadd.f32 %v598, %v621
        %v623 = vpop.f32.mrf.mxu0
        %v624 = vadd.f32 %v598, %v623
        %625 = vdwg.mxu0
        %v626 = vld [vmem:[%s3] sm:$0xf]
        %v627 = vld [vmem:[%s3 + $0x4] sm:$0xf]
        %v628 = vld [vmem:[%s3 + $0x8] sm:$0xf]
        %v629 = vld [vmem:[%s3 + $0xc] sm:$0xf]
        %v630 = vld [vmem:[%s6] sm:$0x1]
        %v632 = vperm.slane %v630, 0
        %v638 = vunpack.c.l.b16 %v626
        %v639 = vunpack.c.l.b16 %v627
        %v640 = vunpack.c.l.b16 %v628
        %v641 = vunpack.c.l.b16 %v629
        %v642 = vpack.c.b16 %v639, %v638
        %v643 = vpack.c.b16 %v641, %v640
        %646 = vmatpush.bf16.msra.mxu0 0
        %647 = vmatpush.bf16.msra.mxu0 0
        %648 = vmatpush.bf16.msra.mxu0 0
        %649 = vmatpush.bf16.msra.mxu0 0
        %650 = vmatpush.bf16.msra.mxu0 0
        %651 = vmatpush.bf16.msra.mxu0 0
        %652 = vmatpush.bf16.msra.mxu0 %v643
        %653 = vmatpush.bf16.msra.mxu0 %v642
        %654 = vmatmul.bf16.gmra.mxu0 %v576
        %v655 = vpop.f32.mrf.mxu0
        %v656 = vadd.f32 %v632, %v655
        %v657 = vpop.f32.mrf.mxu0
        %v658 = vadd.f32 %v632, %v657
        %659 = vdwg.mxu0
        %v660 = vmul.f32 %v588, 0.35355338
        %v661 = vmul.f32 %v590, 0.35355338
        %v662 = vpack.c.bf16 %v660, %v660
        %v663 = vpack.c.bf16 %v661, %v661
        %v664 = vpack.c.bf16 %v622, %v622
        %v665 = vpack.c.bf16 %v624, %v624
        %v666 = vpack.c.bf16 %v656, %v656
        %v667 = vpack.c.bf16 %v658, %v658
        %vm668 = vcmask 64512
        %v670 = vsel %vm668, %v662, 0
        %v673 = vsel %vm668, %v664, 0
        %675 = vmatpush.bf16.xpose.msra.mxu0 0
        %676 = vmatpush.bf16.xpose.msra.mxu0 0
        %677 = vmatpush.bf16.xpose.msra.mxu0 0
        %678 = vmatpush.bf16.xpose.msra.mxu0 0
        %679 = vmatpush.bf16.xpose.msra.mxu0 0
        %680 = vmatpush.bf16.xpose.msra.mxu0 0
        %681 = vmatpush.bf16.xpose.msra.mxu0 0
        %682 = vmatpush.bf16.xpose.msra.mxu0 %v673
        %683 = vmatmul.bf16.gmra.mxu0 %v670
        %v684 = vpop.f32.mrf.mxu0
        %v685 = vadd.f32 0.0, %v684
        %v686 = vpop.f32.mrf.mxu0
        %687 = vdwg.mxu0
        %v689 = vsel %vm668, %v663, 0
        %v692 = vsel %vm668, %v665, 0
        %694 = vmatpush.bf16.xpose.msra.mxu0 0
        %695 = vmatpush.bf16.xpose.msra.mxu0 0
        %696 = vmatpush.bf16.xpose.msra.mxu0 0
        %697 = vmatpush.bf16.xpose.msra.mxu0 0
        %698 = vmatpush.bf16.xpose.msra.mxu0 0
        %699 = vmatpush.bf16.xpose.msra.mxu0 0
        %700 = vmatpush.bf16.xpose.msra.mxu0 0
        %701 = vmatpush.bf16.xpose.msra.mxu0 %v692
        %702 = vmatmul.bf16.gmra.mxu0 %v689
        %v703 = vpop.f32.mrf.mxu0
        %v704 = vadd.f32 0.0, %v703
        %v705 = vpop.f32.mrf.mxu0
        %706 = vdwg.mxu0
        %v707 = vsel %vm668, %v685, -inf
        %708 = vmax.xlane.f32.xlu0 %v707
        %v709 = vpop.xlane.xlu0 %708
        %v710 = vsel %vm668, %v704, -inf
        %711 = vmax.xlane.f32.xlu0 %v710
        %v712 = vpop.xlane.xlu0 %711
        %v713 = vsub.f32 %v685, %v709
        %v714 = vsub.f32 %v704, %v712
        %v715 = vmul.f32 %v713, 1.442695
        %v716 = vpow.pop %v715
        %v717 = vmul.f32 %v714, 1.442695
        %v718 = vpow.pop %v717
        %v719 = vsel %vm668, %v716, 0.0
        %720 = vadd.xlane.f32.xlu0 %v719
        %v721 = vpop.xlane.xlu0 %720
        %v722 = vsel %vm668, %v718, 0.0
        %723 = vadd.xlane.f32.xlu0 %v722
        %v724 = vpop.xlane.xlu0 %723
        %v725 = vrcp.pop %v721
        %v726 = vrcp.pop %v724
        %v727 = vpack.c.bf16 %v716, %v716
        %v728 = vpack.c.bf16 %v718, %v718
        %v730 = vsel %vm668, %v727, 0
        %vm732 = vcmask 1043456
        %v734 = vsel %vm732, %v666, 0
        %736 = vmatpush.bf16.msra.mxu0 0
        %737 = vmatpush.bf16.msra.mxu0 0
        %738 = vmatpush.bf16.msra.mxu0 0
        %739 = vmatpush.bf16.msra.mxu0 0
        %740 = vmatpush.bf16.msra.mxu0 0
        %741 = vmatpush.bf16.msra.mxu0 0
        %742 = vmatpush.bf16.msra.mxu0 0
        %743 = vmatpush.bf16.msra.mxu0 %v734
        %744 = vmatmul.bf16.gmra.mxu0 %v730
        %v745 = vpop.f32.mrf.mxu0
        %v746 = vadd.f32 0.0, %v745
        %v747 = vpop.f32.mrf.mxu0
        %748 = vdwg.mxu0
        %v750 = vsel %vm668, %v728, 0
        %v753 = vsel %vm732, %v667, 0
        %755 = vmatpush.bf16.msra.mxu0 0
        %756 = vmatpush.bf16.msra.mxu0 0
        %757 = vmatpush.bf16.msra.mxu0 0
        %758 = vmatpush.bf16.msra.mxu0 0
        %759 = vmatpush.bf16.msra.mxu0 0
        %760 = vmatpush.bf16.msra.mxu0 0
        %761 = vmatpush.bf16.msra.mxu0 0
        %762 = vmatpush.bf16.msra.mxu0 %v753
        %763 = vmatmul.bf16.gmra.mxu0 %v750
        %v764 = vpop.f32.mrf.mxu0
        %v765 = vadd.f32 0.0, %v764
        %v766 = vpop.f32.mrf.mxu0
        %767 = vdwg.mxu0
        %v768 = vmul.f32 %v746, %v725
        %v769 = vmul.f32 %v765, %v726
        %v770 = vpack.c.bf16 %v768, %v768
        %v771 = vpack.c.bf16 %v769, %v769
        %vm772 = vcmask 60416
        %773 = vst.msk [vmem:[#allocation2] sm:$0xf] %vm772, %v770
        %774 = vst.msk [vmem:[#allocation2 + $0x4] sm:$0xf] %vm772, %v771
        %v776 = vunpack.c.l.b16 %v662
        %v777 = vpack.c.b16 %v776, %v776
        %778 = vrot.lane.b32.xlu0 %v777, 120
        %v779 = vpop.permute.xlu0 %778
        %v781 = vunpack.c.l.b16 %v664
        %v782 = vpack.c.b16 %v781, %v781
        %783 = vrot.lane.b32.xlu0 %v782, 120
        %v784 = vpop.permute.xlu0 %783
        %v786 = vsel %vm668, %v779, 0
        %v789 = vsel %vm668, %v784, 0
        %791 = vmatpush.bf16.xpose.msra.mxu0 0
        %792 = vmatpush.bf16.xpose.msra.mxu0 0
        %793 = vmatpush.bf16.xpose.msra.mxu0 0
        %794 = vmatpush.bf16.xpose.msra.mxu0 0
        %795 = vmatpush.bf16.xpose.msra.mxu0 0
        %796 = vmatpush.bf16.xpose.msra.mxu0 0
        %797 = vmatpush.bf16.xpose.msra.mxu0 0
        %798 = vmatpush.bf16.xpose.msra.mxu0 %v789
        %799 = vmatmul.bf16.gmra.mxu0 %v786
        %v800 = vpop.f32.mrf.mxu0
        %v801 = vadd.f32 0.0, %v800
        %v802 = vpop.f32.mrf.mxu0
        %803 = vdwg.mxu0
        %v805 = vunpack.c.l.b16 %v663
        %v806 = vpack.c.b16 %v805, %v805
        %807 = vrot.lane.b32.xlu0 %v806, 120
        %v808 = vpop.permute.xlu0 %807
        %v810 = vunpack.c.l.b16 %v665
        %v811 = vpack.c.b16 %v810, %v810
        %812 = vrot.lane.b32.xlu0 %v811, 120
        %v813 = vpop.permute.xlu0 %812
        %v815 = vsel %vm668, %v808, 0
        %v818 = vsel %vm668, %v813, 0
        %820 = vmatpush.bf16.xpose.msra.mxu0 0
        %821 = vmatpush.bf16.xpose.msra.mxu0 0
        %822 = vmatpush.bf16.xpose.msra.mxu0 0
        %823 = vmatpush.bf16.xpose.msra.mxu0 0
        %824 = vmatpush.bf16.xpose.msra.mxu0 0
        %825 = vmatpush.bf16.xpose.msra.mxu0 0
        %826 = vmatpush.bf16.xpose.msra.mxu0 0
        %827 = vmatpush.bf16.xpose.msra.mxu0 %v818
        %828 = vmatmul.bf16.gmra.mxu0 %v815
        %v829 = vpop.f32.mrf.mxu0
        %v830 = vadd.f32 0.0, %v829
        %v831 = vpop.f32.mrf.mxu0
        %832 = vdwg.mxu0
        %v833 = vsel %vm668, %v801, -inf
        %834 = vmax.xlane.f32.xlu0 %v833
        %v835 = vpop.xlane.xlu0 %834
        %v836 = vsel %vm668, %v830, -inf
        %837 = vmax.xlane.f32.xlu0 %v836
        %v838 = vpop.xlane.xlu0 %837
        %v839 = vsub.f32 %v801, %v835
        %v840 = vsub.f32 %v830, %v838
        %v841 = vmul.f32 %v839, 1.442695
        %v842 = vpow.pop %v841
        %v843 = vmul.f32 %v840, 1.442695
        %v844 = vpow.pop %v843
        %v845 = vsel %vm668, %v842, 0.0
        %846 = vadd.xlane.f32.xlu0 %v845
        %v847 = vpop.xlane.xlu0 %846
        %v848 = vsel %vm668, %v844, 0.0
        %849 = vadd.xlane.f32.xlu0 %v848
        %v850 = vpop.xlane.xlu0 %849
        %v851 = vrcp.pop %v847
        %v852 = vrcp.pop %v850
        %v853 = vpack.c.bf16 %v842, %v842
        %v854 = vpack.c.bf16 %v844, %v844
        %v856 = vunpack.c.l.b16 %v666
        %v857 = vpack.c.b16 %v856, %v856
        %858 = vrot.lane.b32.xlu0 %v857, 120
        %v859 = vpop.permute.xlu0 %858
        %v861 = vsel %vm668, %v853, 0
        %v864 = vsel %vm732, %v859, 0
        %866 = vmatpush.bf16.msra.mxu0 0
        %867 = vmatpush.bf16.msra.mxu0 0
        %868 = vmatpush.bf16.msra.mxu0 0
        %869 = vmatpush.bf16.msra.mxu0 0
        %870 = vmatpush.bf16.msra.mxu0 0
        %871 = vmatpush.bf16.msra.mxu0 0
        %872 = vmatpush.bf16.msra.mxu0 0
        %873 = vmatpush.bf16.msra.mxu0 %v864
        %874 = vmatmul.bf16.gmra.mxu0 %v861
        %v875 = vpop.f32.mrf.mxu0
        %v876 = vadd.f32 0.0, %v875
        %v877 = vpop.f32.mrf.mxu0
        %878 = vdwg.mxu0
        %v880 = vunpack.c.l.b16 %v667
        %v881 = vpack.c.b16 %v880, %v880
        %882 = vrot.lane.b32.xlu0 %v881, 120
        %v883 = vpop.permute.xlu0 %882
        %v885 = vsel %vm668, %v854, 0
        %v888 = vsel %vm732, %v883, 0
        %890 = vmatpush.bf16.msra.mxu0 0
        %891 = vmatpush.bf16.msra.mxu0 0
        %892 = vmatpush.bf16.msra.mxu0 0
        %893 = vmatpush.bf16.msra.mxu0 0
        %894 = vmatpush.bf16.msra.mxu0 0
        %895 = vmatpush.bf16.msra.mxu0 0
        %896 = vmatpush.bf16.msra.mxu0 0
        %897 = vmatpush.bf16.msra.mxu0 %v888
        %898 = vmatmul.bf16.gmra.mxu0 %v885
        %v899 = vpop.f32.mrf.mxu0
        %v900 = vadd.f32 0.0, %v899
        %v901 = vpop.f32.mrf.mxu0
        %902 = vdwg.mxu0
        %v903 = vmul.f32 %v876, %v851
        %v904 = vmul.f32 %v900, %v852
        %v905 = vpack.c.bf16 %v903, %v903
        %v906 = vpack.c.bf16 %v904, %v904
        %909 = vrot.lane.b32.xlu0 %v905, 8
        %v910 = vpop.permute.xlu0 %909
        %911 = vrot.lane.b32.xlu0 %v906, 8
        %v912 = vpop.permute.xlu0 %911
        %vm915 = vcmask 126016
        %916 = vst.msk [vmem:[#allocation2] sm:$0xf] %vm915, %v910
        %917 = vst.msk [vmem:[#allocation2 + $0x4] sm:$0xf] %vm915, %v912
        %918 = vrot.lane.b32.xlu0 %v777, 112
        %v919 = vpop.permute.xlu0 %918
        %920 = vrot.lane.b32.xlu0 %v782, 112
        %v921 = vpop.permute.xlu0 %920
        %v923 = vsel %vm668, %v919, 0
        %v926 = vsel %vm668, %v921, 0
        %928 = vmatpush.bf16.xpose.msra.mxu0 0
        %929 = vmatpush.bf16.xpose.msra.mxu0 0
        %930 = vmatpush.bf16.xpose.msra.mxu0 0
        %931 = vmatpush.bf16.xpose.msra.mxu0 0
        %932 = vmatpush.bf16.xpose.msra.mxu0 0
        %933 = vmatpush.bf16.xpose.msra.mxu0 0
        %934 = vmatpush.bf16.xpose.msra.mxu0 0
        %935 = vmatpush.bf16.xpose.msra.mxu0 %v926
        %936 = vmatmul.bf16.gmra.mxu0 %v923
        %v937 = vpop.f32.mrf.mxu0
        %v938 = vadd.f32 0.0, %v937
        %v939 = vpop.f32.mrf.mxu0
        %940 = vdwg.mxu0
        %941 = vrot.lane.b32.xlu0 %v806, 112
        %v942 = vpop.permute.xlu0 %941
        %943 = vrot.lane.b32.xlu0 %v811, 112
        %v944 = vpop.permute.xlu0 %943
        %v946 = vsel %vm668, %v942, 0
        %v949 = vsel %vm668, %v944, 0
        %951 = vmatpush.bf16.xpose.msra.mxu0 0
        %952 = vmatpush.bf16.xpose.msra.mxu0 0
        %953 = vmatpush.bf16.xpose.msra.mxu0 0
        %954 = vmatpush.bf16.xpose.msra.mxu0 0
        %955 = vmatpush.bf16.xpose.msra.mxu0 0
        %956 = vmatpush.bf16.xpose.msra.mxu0 0
        %957 = vmatpush.bf16.xpose.msra.mxu0 0
        %958 = vmatpush.bf16.xpose.msra.mxu0 %v949
        %959 = vmatmul.bf16.gmra.mxu0 %v946
        %v960 = vpop.f32.mrf.mxu0
        %v961 = vadd.f32 0.0, %v960
        %v962 = vpop.f32.mrf.mxu0
        %963 = vdwg.mxu0
        %v964 = vsel %vm668, %v938, -inf
        %965 = vmax.xlane.f32.xlu0 %v964
        %v966 = vpop.xlane.xlu0 %965
        %v967 = vsel %vm668, %v961, -inf
        %968 = vmax.xlane.f32.xlu0 %v967
        %v969 = vpop.xlane.xlu0 %968
        %v970 = vsub.f32 %v938, %v966
        %v971 = vsub.f32 %v961, %v969
        %v972 = vmul.f32 %v970, 1.442695
        %v973 = vpow.pop %v972
        %v974 = vmul.f32 %v971, 1.442695
        %v975 = vpow.pop %v974
        %v976 = vsel %vm668, %v973, 0.0
        %977 = vadd.xlane.f32.xlu0 %v976
        %v978 = vpop.xlane.xlu0 %977
        %v979 = vsel %vm668, %v975, 0.0
        %980 = vadd.xlane.f32.xlu0 %v979
        %v981 = vpop.xlane.xlu0 %980
        %v982 = vrcp.pop %v978
        %v983 = vrcp.pop %v981
        %v984 = vpack.c.bf16 %v973, %v973
        %v985 = vpack.c.bf16 %v975, %v975
        %986 = vrot.lane.b32.xlu0 %v857, 112
        %v987 = vpop.permute.xlu0 %986
        %v989 = vsel %vm668, %v984, 0
        %v992 = vsel %vm732, %v987, 0
        %994 = vmatpush.bf16.msra.mxu0 0
        %995 = vmatpush.bf16.msra.mxu0 0
        %996 = vmatpush.bf16.msra.mxu0 0
        %997 = vmatpush.bf16.msra.mxu0 0
        %998 = vmatpush.bf16.msra.mxu0 0
        %999 = vmatpush.bf16.msra.mxu0 0
        %1000 = vmatpush.bf16.msra.mxu0 0
        %1001 = vmatpush.bf16.msra.mxu0 %v992
        %1002 = vmatmul.bf16.gmra.mxu0 %v989
        %v1003 = vpop.f32.mrf.mxu0
        %v1004 = vadd.f32 0.0, %v1003
        %v1005 = vpop.f32.mrf.mxu0
        %1006 = vdwg.mxu0
        %1007 = vrot.lane.b32.xlu0 %v881, 112
        %v1008 = vpop.permute.xlu0 %1007
        %v1010 = vsel %vm668, %v985, 0
        %v1013 = vsel %vm732, %v1008, 0
        %1015 = vmatpush.bf16.msra.mxu0 0
        %1016 = vmatpush.bf16.msra.mxu0 0
        %1017 = vmatpush.bf16.msra.mxu0 0
        %1018 = vmatpush.bf16.msra.mxu0 0
        %1019 = vmatpush.bf16.msra.mxu0 0
        %1020 = vmatpush.bf16.msra.mxu0 0
        %1021 = vmatpush.bf16.msra.mxu0 0
        %1022 = vmatpush.bf16.msra.mxu0 %v1013
        %1023 = vmatmul.bf16.gmra.mxu0 %v1010
        %v1024 = vpop.f32.mrf.mxu0
        %v1025 = vadd.f32 0.0, %v1024
        %v1026 = vpop.f32.mrf.mxu0
        %1027 = vdwg.mxu0
        %v1028 = vmul.f32 %v1004, %v982
        %v1029 = vmul.f32 %v1025, %v983
        %v1030 = vpack.c.bf16 %v1028, %v1028
        %v1031 = vpack.c.bf16 %v1029, %v1029
        %1034 = vrot.lane.b32.xlu0 %v1030, 16
        %v1035 = vpop.permute.xlu0 %1034
        %1036 = vrot.lane.b32.xlu0 %v1031, 16
        %v1037 = vpop.permute.xlu0 %1036
        %vm1040 = vcmask 191616
        %1041 = vst.msk [vmem:[#allocation2] sm:$0xf] %vm1040, %v1035
        %1042 = vst.msk [vmem:[#allocation2 + $0x4] sm:$0xf] %vm1040, %v1037
        %1043 = vrot.lane.b32.xlu0 %v777, 104
        %v1044 = vpop.permute.xlu0 %1043
        %1045 = vrot.lane.b32.xlu0 %v782, 104
        %v1046 = vpop.permute.xlu0 %1045
        %v1048 = vsel %vm668, %v1044, 0
        %v1051 = vsel %vm668, %v1046, 0
        %1053 = vmatpush.bf16.xpose.msra.mxu0 0
        %1054 = vmatpush.bf16.xpose.msra.mxu0 0
        %1055 = vmatpush.bf16.xpose.msra.mxu0 0
        %1056 = vmatpush.bf16.xpose.msra.mxu0 0
        %1057 = vmatpush.bf16.xpose.msra.mxu0 0
        %1058 = vmatpush.bf16.xpose.msra.mxu0 0
        %1059 = vmatpush.bf16.xpose.msra.mxu0 0
        %1060 = vmatpush.bf16.xpose.msra.mxu0 %v1051
        %1061 = vmatmul.bf16.gmra.mxu0 %v1048
        %v1062 = vpop.f32.mrf.mxu0
        %v1063 = vadd.f32 0.0, %v1062
        %v1064 = vpop.f32.mrf.mxu0
        %1065 = vdwg.mxu0
        %1066 = vrot.lane.b32.xlu0 %v806, 104
        %v1067 = vpop.permute.xlu0 %1066
        %1068 = vrot.lane.b32.xlu0 %v811, 104
        %v1069 = vpop.permute.xlu0 %1068
        %v1071 = vsel %vm668, %v1067, 0
        %v1074 = vsel %vm668, %v1069, 0
        %1076 = vmatpush.bf16.xpose.msra.mxu0 0
        %1077 = vmatpush.bf16.xpose.msra.mxu0 0
        %1078 = vmatpush.bf16.xpose.msra.mxu0 0
        %1079 = vmatpush.bf16.xpose.msra.mxu0 0
        %1080 = vmatpush.bf16.xpose.msra.mxu0 0
        %1081 = vmatpush.bf16.xpose.msra.mxu0 0
        %1082 = vmatpush.bf16.xpose.msra.mxu0 0
        %1083 = vmatpush.bf16.xpose.msra.mxu0 %v1074
        %1084 = vmatmul.bf16.gmra.mxu0 %v1071
        %v1085 = vpop.f32.mrf.mxu0
        %v1086 = vadd.f32 0.0, %v1085
        %v1087 = vpop.f32.mrf.mxu0
        %1088 = vdwg.mxu0
        %v1089 = vsel %vm668, %v1063, -inf
        %1090 = vmax.xlane.f32.xlu0 %v1089
        %v1091 = vpop.xlane.xlu0 %1090
        %v1092 = vsel %vm668, %v1086, -inf
        %1093 = vmax.xlane.f32.xlu0 %v1092
        %v1094 = vpop.xlane.xlu0 %1093
        %v1095 = vsub.f32 %v1063, %v1091
        %v1096 = vsub.f32 %v1086, %v1094
        %v1097 = vmul.f32 %v1095, 1.442695
        %v1098 = vpow.pop %v1097
        %v1099 = vmul.f32 %v1096, 1.442695
        %v1100 = vpow.pop %v1099
        %v1101 = vsel %vm668, %v1098, 0.0
        %1102 = vadd.xlane.f32.xlu0 %v1101
        %v1103 = vpop.xlane.xlu0 %1102
        %v1104 = vsel %vm668, %v1100, 0.0
        %1105 = vadd.xlane.f32.xlu0 %v1104
        %v1106 = vpop.xlane.xlu0 %1105
        %v1107 = vrcp.pop %v1103
        %v1108 = vrcp.pop %v1106
        %v1109 = vpack.c.bf16 %v1098, %v1098
        %v1110 = vpack.c.bf16 %v1100, %v1100
        %1111 = vrot.lane.b32.xlu0 %v857, 104
        %v1112 = vpop.permute.xlu0 %1111
        %v1114 = vsel %vm668, %v1109, 0
        %v1117 = vsel %vm732, %v1112, 0
        %1119 = vmatpush.bf16.msra.mxu0 0
        %1120 = vmatpush.bf16.msra.mxu0 0
        %1121 = vmatpush.bf16.msra.mxu0 0
        %1122 = vmatpush.bf16.msra.mxu0 0
        %1123 = vmatpush.bf16.msra.mxu0 0
        %1124 = vmatpush.bf16.msra.mxu0 0
        %1125 = vmatpush.bf16.msra.mxu0 0
        %1126 = vmatpush.bf16.msra.mxu0 %v1117
        %1127 = vmatmul.bf16.gmra.mxu0 %v1114
        %v1128 = vpop.f32.mrf.mxu0
        %v1129 = vadd.f32 0.0, %v1128
        %v1130 = vpop.f32.mrf.mxu0
        %1131 = vdwg.mxu0
        %1132 = vrot.lane.b32.xlu0 %v881, 104
        %v1133 = vpop.permute.xlu0 %1132
        %v1135 = vsel %vm668, %v1110, 0
        %v1138 = vsel %vm732, %v1133, 0
        %1140 = vmatpush.bf16.msra.mxu0 0
        %1141 = vmatpush.bf16.msra.mxu0 0
        %1142 = vmatpush.bf16.msra.mxu0 0
        %1143 = vmatpush.bf16.msra.mxu0 0
        %1144 = vmatpush.bf16.msra.mxu0 0
        %1145 = vmatpush.bf16.msra.mxu0 0
        %1146 = vmatpush.bf16.msra.mxu0 0
        %1147 = vmatpush.bf16.msra.mxu0 %v1138
        %1148 = vmatmul.bf16.gmra.mxu0 %v1135
        %v1149 = vpop.f32.mrf.mxu0
        %v1150 = vadd.f32 0.0, %v1149
        %v1151 = vpop.f32.mrf.mxu0
        %1152 = vdwg.mxu0
        %v1153 = vmul.f32 %v1129, %v1107
        %v1154 = vmul.f32 %v1150, %v1108
        %v1155 = vpack.c.bf16 %v1153, %v1153
        %v1156 = vpack.c.bf16 %v1154, %v1154
        %1159 = vrot.lane.b32.xlu0 %v1155, 24
        %v1160 = vpop.permute.xlu0 %1159
        %1161 = vrot.lane.b32.xlu0 %v1156, 24
        %v1162 = vpop.permute.xlu0 %1161
        %vm1165 = vcmask 257216
        %1166 = vst.msk [vmem:[#allocation2] sm:$0xf] %vm1165, %v1160
        %1167 = vst.msk [vmem:[#allocation2 + $0x4] sm:$0xf] %vm1165, %v1162
        %v1168 = vld [vmem:[#allocation2] sm:$0xf]
        %v1169 = vld [vmem:[#allocation2 + $0x4] sm:$0xf]
        %v1170 = vld [vmem:[%s7] sm:$0xf]
        %v1171 = vld [vmem:[%s7 + $0x4] sm:$0xf]
        %v1172 = vld [vmem:[%s7 + $0x8] sm:$0xf]
        %v1173 = vld [vmem:[%s7 + $0xc] sm:$0xf]
        %v1174 = vld [vmem:[%s8] sm:$0x1]
        %v1176 = vperm.slane %v1174, 0
        %v1180 = vunpack.c.l.b16 %v1168
        %v1181 = vunpack.c.l.b16 %v1169
        %v1182 = vpack.c.b16 %v1181, %v1180
        %v1187 = vunpack.c.l.b16 %v1170
        %v1188 = vunpack.c.l.b16 %v1171
        %v1189 = vunpack.c.l.b16 %v1172
        %v1190 = vunpack.c.l.b16 %v1173
        %v1191 = vpack.c.b16 %v1188, %v1187
        %v1192 = vpack.c.b16 %v1190, %v1189
        %v1196 = vsel %vm574, %v1182, 0
        %1198 = vmatpush.bf16.msra.mxu0 0
        %1199 = vmatpush.bf16.msra.mxu0 0
        %1200 = vmatpush.bf16.msra.mxu0 0
        %1201 = vmatpush.bf16.msra.mxu0 0
        %1202 = vmatpush.bf16.msra.mxu0 0
        %1203 = vmatpush.bf16.msra.mxu0 0
        %1204 = vmatpush.bf16.msra.mxu0 %v1192
        %1205 = vmatpush.bf16.msra.mxu0 %v1191
        %1206 = vmatmul.bf16.gmra.mxu0 %v1196
        %v1207 = vpop.f32.mrf.mxu0
        %v1208 = vadd.f32 %v1176, %v1207
        %v1209 = vpop.f32.mrf.mxu0
        %v1210 = vadd.f32 %v1176, %v1209
        %1211 = vdwg.mxu0
        %v1212 = vadd.f32 %v1208, %v551
        %v1213 = vadd.f32 %v1210, %v552
        %v1214 = vld [vmem:[%s9] sm:$0x1]
        %v1215 = vld [vmem:[%s10] sm:$0x1]
        %v1216 = vsel %vm574, %v1212, 0.0
        %1217 = vadd.xlane.f32.xlu0 %v1216
        %v1218 = vpop.xlane.xlu0 %1217
        %v1219 = vsel %vm574, %v1213, 0.0
        %1220 = vadd.xlane.f32.xlu0 %v1219
        %v1221 = vpop.xlane.xlu0 %1220
        %v1222 = vrcp.pop 32.0
        %v1223 = vmul.f32 32.0, %v1222
        %v1224 = vsub.f32 1.0, %v1223
        %v1225 = vmul.f32 %v1222, %v1224
        %v1226 = vadd.f32 %v1222, %v1225
        %vm1227 = vweird.f32 %v1222
        %v1228 = vsel %vm1227, %v1222, %v1226
        %v1229 = vmul.f32 %v1218, %v1228
        %v1230 = vmul.f32 %v1221, %v1228
        %v1231 = vsub.f32 %v1212, %v1229
        %v1232 = vsub.f32 %v1213, %v1230
        %v1233 = vmul.f32 %v1231, %v1231
        %v1234 = vmul.f32 %v1232, %v1232
        %v1235 = vsel %vm574, %v1233, 0.0
        %1236 = vadd.xlane.f32.xlu0 %v1235
        %v1237 = vpop.xlane.xlu0 %1236
        %v1238 = vsel %vm574, %v1234, 0.0
        %1239 = vadd.xlane.f32.xlu0 %v1238
        %v1240 = vpop.xlane.xlu0 %1239
        %v1241 = vmul.f32 %v1237, %v1228
        %v1242 = vmul.f32 %v1240, %v1228
        %v1243 = vadd.f32 %v1241, 1e-05
        %v1244 = vadd.f32 %v1242, 1e-05
        %v1245 = vrsqrt.pop %v1243
        %v1246 = vmul.f32 %v1245, %v1243
        %v1247 = vmul.f32 %v1246, %v1245
        %v1248 = vmul.f32 0.5, %v1247
        %v1249 = vsub.f32 1.5, %v1248
        %v1250 = vmul.f32 %v1245, %v1249
        %vm1251 = vweird.f32 %v1243
        %vm1252 = vweird.f32 %v1245
        %vm1253 = vmor %vm1251, %vm1252
        %v1254 = vsel %vm1253, %v1245, %v1250
        %v1255 = vrsqrt.pop %v1244
        %v1256 = vmul.f32 %v1255, %v1244
        %v1257 = vmul.f32 %v1256, %v1255
        %v1258 = vmul.f32 0.5, %v1257
        %v1259 = vsub.f32 1.5, %v1258
        %v1260 = vmul.f32 %v1255, %v1259
        %vm1261 = vweird.f32 %v1244
        %vm1262 = vweird.f32 %v1255
        %vm1263 = vmor %vm1261, %vm1262
        %v1264 = vsel %vm1263, %v1255, %v1260
        %v1265 = vmul.f32 %v1231, %v1254
        %v1266 = vmul.f32 %v1232, %v1264
        %v1268 = vperm.slane %v1214, 0
        %v1270 = vmul.f32 %v1265, %v1268
        %v1271 = vmul.f32 %v1266, %v1268
        %v1273 = vperm.slane %v1215, 0
        %v1275 = vadd.f32 %v1270, %v1273
        %v1276 = vadd.f32 %v1271, %v1273
        %v1277 = vlaneseq
        %v1278 = vshrl.u32 %v1277, 7
        %v1279 = vadd.s32 %v1278, 8
        %vm1280 = vcmp.lt.s32.totalorder %v1278, 0
        %v1281 = vsub.s32 0, %v1278
        %v1282 = vsel %vm1280, %v1281, %v1278
        %v1283 = vshrl.u32 %v1282, 3
        %v1284 = vand.u32 %v1282, 7
        %v1285 = vsub.s32 0, %v1284
        %v1286 = vsel %vm1280, %v1285, %v1284
        %vm1287 = vcmp.lt.s32.totalorder %v1279, 0
        %v1288 = vsub.s32 0, %v1279
        %v1289 = vsel %vm1287, %v1288, %v1279
        %v1290 = vshrl.u32 %v1289, 3
        %v1291 = vand.u32 %v1289, 7
        %v1292 = vsub.s32 0, %v1291
        %v1293 = vsel %vm1287, %v1292, %v1291
        %vm1294 = vcmp.ne.s32.totalorder %v1286, 0
        %vm1295 = vcmp.ne.s32.totalorder %v1293, 0
        %vm1296 = vcmp.lt.s32.totalorder %v1286, 0
        %vm1297 = vcmp.lt.s32.totalorder %v1293, 0
        %vm1298 = vmand %vm1296, %vm1294
        %vm1299 = vmand %vm1297, %vm1295
        %v1300 = vadd.s32 %v1286, 8
        %v1301 = vadd.s32 %v1293, 8
        %v1302 = vsel %vm1298, %v1300, %v1286
        %v1303 = vsel %vm1299, %v1301, %v1293
        %vm1304 = vcmp.eq.s32.totalorder %v1302, 0
        %vm1305 = vcmp.eq.s32.totalorder %v1303, 0
        %vm1306 = vcmp.eq.s32.totalorder %v1302, 7
        %vm1307 = vcmp.eq.s32.totalorder %v1303, 7
        %v1308 = vrot.slane %v1275, 7
        %v1309 = vrot.slane %v1276, 7
        %vm1310 = vcmp.lt.s32.totalorder %v1278, 1
        %v1311 = vsel %vm1310, %v1308, %v1309
        %v1312 = vsel %vm1310, %v1309, %v1308
        %v1313 = vsel %vm1304, 1, 0
        %v1314 = vsel %vm1305, 1, 0
        %vm1315 = vcmp.eq.s32.totalorder %v1313, 1
        %vm1316 = vcmp.eq.s32.totalorder %v1314, 1
        %v1317 = vsel %vm1315, 0.0, %v1312
        %v1318 = vsel %vm1316, 0.0, %v1311
        %v1319 = vrot.slane %v1275, 1
        %v1320 = vrot.slane %v1276, 1
        %vm1321 = vcmp.lt.s32.totalorder %v1278, 7
        %v1322 = vsel %vm1321, %v1319, %v1320
        %v1323 = vsel %vm1321, %v1320, %v1319
        %v1324 = vsel %vm1306, 1, 0
        %v1325 = vsel %vm1307, 1, 0
        %vm1326 = vcmp.eq.s32.totalorder %v1324, 1
        %vm1327 = vcmp.eq.s32.totalorder %v1325, 1
        %v1328 = vsel %vm1326, 0.0, %v1322
        %v1329 = vsel %vm1327, 0.0, %v1323
        %v1330 = vpack.c.bf16 %v1318, %v1317
        %v1331 = vpack.c.bf16 %v1329, %v1328
        %v1332 = vpack.c.bf16 %v1276, %v1275
        %s1333 = scalar_lea.vmem %s11, 16
        %v1334 = vld [vmem:[%s1333] sm:$0xf]
        %v1335 = vld [vmem:[%s1333 + $0x4] sm:$0xf]
        %v1336 = vld [vmem:[%s1333 + $0x8] sm:$0xf]
        %v1337 = vld [vmem:[%s1333 + $0xc] sm:$0xf]
        %v1338 = vld [vmem:[%s11] sm:$0xf]
        %v1339 = vld [vmem:[%s11 + $0x4] sm:$0xf]
        %v1340 = vld [vmem:[%s11 + $0x8] sm:$0xf]
        %v1341 = vld [vmem:[%s11 + $0xc] sm:$0xf]
        %v1346 = vunpack.c.l.b16 %v1338
        %v1347 = vunpack.c.l.b16 %v1339
        %v1348 = vunpack.c.l.b16 %v1340
        %v1349 = vunpack.c.l.b16 %v1341
        %v1350 = vpack.c.b16 %v1347, %v1346
        %v1351 = vpack.c.b16 %v1349, %v1348
        %v1355 = vsel %vm574, %v1330, 0
        %1357 = vmatpush.bf16.msra.mxu0 0
        %1358 = vmatpush.bf16.msra.mxu0 0
        %1359 = vmatpush.bf16.msra.mxu0 0
        %1360 = vmatpush.bf16.msra.mxu0 0
        %1361 = vmatpush.bf16.msra.mxu0 0
        %1362 = vmatpush.bf16.msra.mxu0 0
        %1363 = vmatpush.bf16.msra.mxu0 %v1351
        %1364 = vmatpush.bf16.msra.mxu0 %v1350
        %1365 = vmatmul.bf16.gmra.mxu0 %v1355
        %v1366 = vpop.f32.mrf.mxu0
        %v1367 = vadd.f32 0.0, %v1366
        %v1368 = vpop.f32.mrf.mxu0
        %v1369 = vadd.f32 0.0, %v1368
        %1370 = vdwg.mxu0
        %v1375 = vunpack.c.l.b16 %v1334
        %v1376 = vunpack.c.l.b16 %v1335
        %v1377 = vunpack.c.l.b16 %v1336
        %v1378 = vunpack.c.l.b16 %v1337
        %v1379 = vpack.c.b16 %v1376, %v1375
        %v1380 = vpack.c.b16 %v1378, %v1377
        %v1384 = vsel %vm574, %v1332, 0
        %1386 = vmatpush.bf16.msra.mxu0 0
        %1387 = vmatpush.bf16.msra.mxu0 0
        %1388 = vmatpush.bf16.msra.mxu0 0
        %1389 = vmatpush.bf16.msra.mxu0 0
        %1390 = vmatpush.bf16.msra.mxu0 0
        %1391 = vmatpush.bf16.msra.mxu0 0
        %1392 = vmatpush.bf16.msra.mxu0 %v1380
        %1393 = vmatpush.bf16.msra.mxu0 %v1379
        %1394 = vmatmul.bf16.gmra.mxu0 %v1384
        %v1395 = vpop.f32.mrf.mxu0
        %v1396 = vadd.f32 %v1367, %v1395
        %v1397 = vpop.f32.mrf.mxu0
        %v1398 = vadd.f32 %v1369, %v1397
        %1399 = vdwg.mxu0
        %s1400 = scalar_lea.vmem %s11, 32
        %v1401 = vld [vmem:[%s1400] sm:$0xf]
        %v1402 = vld [vmem:[%s1400 + $0x4] sm:$0xf]
        %v1403 = vld [vmem:[%s1400 + $0x8] sm:$0xf]
        %v1404 = vld [vmem:[%s1400 + $0xc] sm:$0xf]
        %v1409 = vunpack.c.l.b16 %v1401
        %v1410 = vunpack.c.l.b16 %v1402
        %v1411 = vunpack.c.l.b16 %v1403
        %v1412 = vunpack.c.l.b16 %v1404
        %v1413 = vpack.c.b16 %v1410, %v1409
        %v1414 = vpack.c.b16 %v1412, %v1411
        %v1418 = vsel %vm574, %v1331, 0
        %1420 = vmatpush.bf16.msra.mxu0 0
        %1421 = vmatpush.bf16.msra.mxu0 0
        %1422 = vmatpush.bf16.msra.mxu0 0
        %1423 = vmatpush.bf16.msra.mxu0 0
        %1424 = vmatpush.bf16.msra.mxu0 0
        %1425 = vmatpush.bf16.msra.mxu0 0
        %1426 = vmatpush.bf16.msra.mxu0 %v1414
        %1427 = vmatpush.bf16.msra.mxu0 %v1413
        %1428 = vmatmul.bf16.gmra.mxu0 %v1418
        %v1429 = vpop.f32.mrf.mxu0
        %v1430 = vadd.f32 0.0, %v1429
        %v1431 = vpop.f32.mrf.mxu0
        %v1432 = vadd.f32 0.0, %v1431
        %1433 = vdwg.mxu0
        %v1434 = vadd.f32 %v1396, %v1430
        %v1435 = vadd.f32 %v1398, %v1432
        %v1436 = vld [vmem:[%s12] sm:$0x1]
        %v1438 = vperm.slane %v1436, 0
        %v1440 = vadd.f32 %v1434, %v1438
        %v1441 = vadd.f32 %v1435, %v1438
        %v1442 = vmax.f32 %v1440, 0.0
        %v1443 = vmax.f32 %v1441, 0.0
        %v1444 = vrot.slane %v1442, 7
        %v1445 = vrot.slane %v1443, 7
        %v1446 = vsel %vm1310, %v1444, %v1445
        %v1447 = vsel %vm1310, %v1445, %v1444
        %v1448 = vsel %vm1315, 0.0, %v1447
        %v1449 = vsel %vm1316, 0.0, %v1446
        %v1450 = vrot.slane %v1442, 1
        %v1451 = vrot.slane %v1443, 1
        %v1452 = vsel %vm1321, %v1450, %v1451
        %v1453 = vsel %vm1321, %v1451, %v1450
        %v1454 = vsel %vm1326, 0.0, %v1452
        %v1455 = vsel %vm1327, 0.0, %v1453
        %v1456 = vpack.c.bf16 %v1449, %v1448
        %v1457 = vpack.c.bf16 %v1455, %v1454
        %v1458 = vpack.c.bf16 %v1443, %v1442
        %s1459 = scalar_lea.vmem %s13, 32
        %v1460 = vld [vmem:[%s1459] sm:$0xf]
        %v1461 = vld [vmem:[%s1459 + $0x4] sm:$0xf]
        %v1462 = vld [vmem:[%s1459 + $0x8] sm:$0xf]
        %v1463 = vld [vmem:[%s1459 + $0xc] sm:$0xf]
        %v1464 = vld [vmem:[%s1459 + $0x10] sm:$0xf]
        %v1465 = vld [vmem:[%s1459 + $0x14] sm:$0xf]
        %v1466 = vld [vmem:[%s1459 + $0x18] sm:$0xf]
        %v1467 = vld [vmem:[%s1459 + $0x1c] sm:$0xf]
        %v1468 = vld [vmem:[%s13] sm:$0xf]
        %v1469 = vld [vmem:[%s13 + $0x4] sm:$0xf]
        %v1470 = vld [vmem:[%s13 + $0x8] sm:$0xf]
        %v1471 = vld [vmem:[%s13 + $0xc] sm:$0xf]
        %v1472 = vld [vmem:[%s13 + $0x10] sm:$0xf]
        %v1473 = vld [vmem:[%s13 + $0x14] sm:$0xf]
        %v1474 = vld [vmem:[%s13 + $0x18] sm:$0xf]
        %v1475 = vld [vmem:[%s13 + $0x1c] sm:$0xf]
        %v1484 = vunpack.c.l.b16 %v1468
        %v1485 = vunpack.c.l.b16 %v1469
        %v1486 = vunpack.c.l.b16 %v1470
        %v1487 = vunpack.c.l.b16 %v1471
        %v1488 = vunpack.c.l.b16 %v1472
        %v1489 = vunpack.c.l.b16 %v1473
        %v1490 = vunpack.c.l.b16 %v1474
        %v1491 = vunpack.c.l.b16 %v1475
        %v1492 = vpack.c.b16 %v1485, %v1484
        %v1493 = vpack.c.b16 %v1487, %v1486
        %v1494 = vpack.c.b16 %v1489, %v1488
        %v1495 = vpack.c.b16 %v1491, %v1490
        %vm1500 = vcmask 523264
        %v1502 = vsel %vm1500, %v1456, 0
        %1504 = vmatpush.bf16.msra.mxu0 0
        %1505 = vmatpush.bf16.msra.mxu0 0
        %1506 = vmatpush.bf16.msra.mxu0 0
        %1507 = vmatpush.bf16.msra.mxu0 0
        %1508 = vmatpush.bf16.msra.mxu0 %v1495
        %1509 = vmatpush.bf16.msra.mxu0 %v1494
        %1510 = vmatpush.bf16.msra.mxu0 %v1493
        %1511 = vmatpush.bf16.msra.mxu0 %v1492
        %1512 = vmatmul.bf16.gmra.mxu0 %v1502
        %v1513 = vpop.f32.mrf.mxu0
        %v1514 = vadd.f32 0.0, %v1513
        %v1515 = vpop.f32.mrf.mxu0
        %v1516 = vadd.f32 0.0, %v1515
        %1517 = vdwg.mxu0
        %v1526 = vunpack.c.l.b16 %v1460
        %v1527 = vunpack.c.l.b16 %v1461
        %v1528 = vunpack.c.l.b16 %v1462
        %v1529 = vunpack.c.l.b16 %v1463
        %v1530 = vunpack.c.l.b16 %v1464
        %v1531 = vunpack.c.l.b16 %v1465
        %v1532 = vunpack.c.l.b16 %v1466
        %v1533 = vunpack.c.l.b16 %v1467
        %v1534 = vpack.c.b16 %v1527, %v1526
        %v1535 = vpack.c.b16 %v1529, %v1528
        %v1536 = vpack.c.b16 %v1531, %v1530
        %v1537 = vpack.c.b16 %v1533, %v1532
        %v1543 = vsel %vm1500, %v1458, 0
        %1545 = vmatpush.bf16.msra.mxu0 0
        %1546 = vmatpush.bf16.msra.mxu0 0
        %1547 = vmatpush.bf16.msra.mxu0 0
        %1548 = vmatpush.bf16.msra.mxu0 0
        %1549 = vmatpush.bf16.msra.mxu0 %v1537
        %1550 = vmatpush.bf16.msra.mxu0 %v1536
        %1551 = vmatpush.bf16.msra.mxu0 %v1535
        %1552 = vmatpush.bf16.msra.mxu0 %v1534
        %1553 = vmatmul.bf16.gmra.mxu0 %v1543
        %v1554 = vpop.f32.mrf.mxu0
        %v1555 = vadd.f32 %v1514, %v1554
        %v1556 = vpop.f32.mrf.mxu0
        %v1557 = vadd.f32 %v1516, %v1556
        %1558 = vdwg.mxu0
        %s1559 = scalar_lea.vmem %s13, 64
        %v1560 = vld [vmem:[%s1559] sm:$0xf]
        %v1561 = vld [vmem:[%s1559 + $0x4] sm:$0xf]
        %v1562 = vld [vmem:[%s1559 + $0x8] sm:$0xf]
        %v1563 = vld [vmem:[%s1559 + $0xc] sm:$0xf]
        %v1564 = vld [vmem:[%s1559 + $0x10] sm:$0xf]
        %v1565 = vld [vmem:[%s1559 + $0x14] sm:$0xf]
        %v1566 = vld [vmem:[%s1559 + $0x18] sm:$0xf]
        %v1567 = vld [vmem:[%s1559 + $0x1c] sm:$0xf]
        %v1576 = vunpack.c.l.b16 %v1560
        %v1577 = vunpack.c.l.b16 %v1561
        %v1578 = vunpack.c.l.b16 %v1562
        %v1579 = vunpack.c.l.b16 %v1563
        %v1580 = vunpack.c.l.b16 %v1564
        %v1581 = vunpack.c.l.b16 %v1565
        %v1582 = vunpack.c.l.b16 %v1566
        %v1583 = vunpack.c.l.b16 %v1567
        %v1584 = vpack.c.b16 %v1577, %v1576
        %v1585 = vpack.c.b16 %v1579, %v1578
        %v1586 = vpack.c.b16 %v1581, %v1580
        %v1587 = vpack.c.b16 %v1583, %v1582
        %v1593 = vsel %vm1500, %v1457, 0
        %1595 = vmatpush.bf16.msra.mxu0 0
        %1596 = vmatpush.bf16.msra.mxu0 0
        %1597 = vmatpush.bf16.msra.mxu0 0
        %1598 = vmatpush.bf16.msra.mxu0 0
        %1599 = vmatpush.bf16.msra.mxu0 %v1587
        %1600 = vmatpush.bf16.msra.mxu0 %v1586
        %1601 = vmatpush.bf16.msra.mxu0 %v1585
        %1602 = vmatpush.bf16.msra.mxu0 %v1584
        %1603 = vmatmul.bf16.gmra.mxu0 %v1593
        %v1604 = vpop.f32.mrf.mxu0
        %v1605 = vadd.f32 0.0, %v1604
        %v1606 = vpop.f32.mrf.mxu0
        %v1607 = vadd.f32 0.0, %v1606
        %1608 = vdwg.mxu0
        %v1609 = vadd.f32 %v1555, %v1605
        %v1610 = vadd.f32 %v1557, %v1607
        %v1611 = vld [vmem:[%s14] sm:$0x1]
        %v1613 = vperm.slane %v1611, 0
        %v1615 = vadd.f32 %v1609, %v1613
        %v1616 = vadd.f32 %v1610, %v1613
        %v1617 = vmax.f32 %v1615, 0.0
        %v1618 = vmax.f32 %v1616, 0.0
        %v1619 = vadd.f32 %v1617, %v1275
        %v1620 = vadd.f32 %v1618, %v1276
        %v1621 = vld [vmem:[%s15] sm:$0x1]
        %v1622 = vld [vmem:[%s16] sm:$0x1]
        %v1623 = vsel %vm574, %v1619, 0.0
        %1624 = vadd.xlane.f32.xlu0 %v1623
        %v1625 = vpop.xlane.xlu0 %1624
        %v1626 = vsel %vm574, %v1620, 0.0
        %1627 = vadd.xlane.f32.xlu0 %v1626
        %v1628 = vpop.xlane.xlu0 %1627
        %v1629 = vmul.f32 %v1625, %v1228
        %v1630 = vmul.f32 %v1628, %v1228
        %v1631 = vsub.f32 %v1619, %v1629
        %v1632 = vsub.f32 %v1620, %v1630
        %v1633 = vmul.f32 %v1631, %v1631
        %v1634 = vmul.f32 %v1632, %v1632
        %v1635 = vsel %vm574, %v1633, 0.0
        %1636 = vadd.xlane.f32.xlu0 %v1635
        %v1637 = vpop.xlane.xlu0 %1636
        %v1638 = vsel %vm574, %v1634, 0.0
        %1639 = vadd.xlane.f32.xlu0 %v1638
        %v1640 = vpop.xlane.xlu0 %1639
        %v1641 = vmul.f32 %v1637, %v1228
        %v1642 = vmul.f32 %v1640, %v1228
        %v1643 = vadd.f32 %v1641, 1e-05
        %v1644 = vadd.f32 %v1642, 1e-05
        %v1645 = vrsqrt.pop %v1643
        %v1646 = vmul.f32 %v1645, %v1643
        %v1647 = vmul.f32 %v1646, %v1645
        %v1648 = vmul.f32 0.5, %v1647
        %v1649 = vsub.f32 1.5, %v1648
        %v1650 = vmul.f32 %v1645, %v1649
        %vm1651 = vweird.f32 %v1643
        %vm1652 = vweird.f32 %v1645
        %vm1653 = vmor %vm1651, %vm1652
        %v1654 = vsel %vm1653, %v1645, %v1650
        %v1655 = vrsqrt.pop %v1644
        %v1656 = vmul.f32 %v1655, %v1644
        %v1657 = vmul.f32 %v1656, %v1655
        %v1658 = vmul.f32 0.5, %v1657
        %v1659 = vsub.f32 1.5, %v1658
        %v1660 = vmul.f32 %v1655, %v1659
        %vm1661 = vweird.f32 %v1644
        %vm1662 = vweird.f32 %v1655
        %vm1663 = vmor %vm1661, %vm1662
        %v1664 = vsel %vm1663, %v1655, %v1660
        %v1665 = vmul.f32 %v1631, %v1654
        %v1666 = vmul.f32 %v1632, %v1664
        %v1668 = vperm.slane %v1621, 0
        %v1670 = vmul.f32 %v1665, %v1668
        %v1671 = vmul.f32 %v1666, %v1668
        %v1673 = vperm.slane %v1622, 0
        %v1675 = vadd.f32 %v1670, %v1673
        %v1676 = vadd.f32 %v1671, %v1673
        %1677 = vst.msk [vmem:[%s542] sm:$0xff] %vm574, %v1675
        %1678 = vst.msk [vmem:[%s542 + $0x8] sm:$0xff] %vm574, %v1676
        %s1679 = sand.u32 %s401, 1
        %s1680 = scalar_lea.sflag [#allocation4], %s1679
        %s1681 = sand.u32 %s401, 1
        %s1682 = smul.addr %s1681, 16
        %s1683 = scalar_lea.vmem [#allocation3], %s1682
        // Predicated region
        $region89: #{fft_block.1} parent=87 // pred_check
          %p1684 = pneg %p411
        $region90: #{fft_block.1} parent=87 // pred_check_branch
          %1686 = sbr.rel (%p1684) target = $region92
        $region91: #{fft_block.1} parent=87 // pred_region
          %s1687 = smul.u32 2, %s31
          %1689 = vsyncadd %s1680, 0
          %s1690 = smul.addr %s1687, 8
          %s1691 = scalar_lea.hbm %s17, %s1690
          %s1692 = sshll.u32 %s1683, 4
          %s1693 = int_to_ptr.vmem [resolvable:$true] %s1692
          %s1694 = sshll.u32 %s1691, 4
          %s1695 = int_to_ptr.hbm [resolvable:$true] %s1694
          %1700 = dma.vmem_to_hbm [thread:$0]  %s1693, 256, %s1695, %s1680, 128, 128, 8
        $region92: #{fft_block.1} parent=87 // pred_fallthru
          _
      $region88: #{fft_block.1} parent=5 // pred_fallthru
        _
      %p1701 = scmp.le.s32.totalorder 2, %s26
      // Predicated region
      $region93: #{fft_block.1} parent=5 // pred_check
        %p1702 = pneg %p1701
      $region94: #{fft_block.1} parent=5 // pred_check_branch
        %1704 = sbr.rel (%p1702) target = $region96
      $region95: #{fft_block.1} parent=5 // pred_region
        %s1705 = ssub.s32 %s26, 2
        // Predicated region
        $region97: #{fft_block.1} parent=95 // pred_check
          %p1706 = pneg %p417
        $region98: #{fft_block.1} parent=95 // pred_check_branch
          %1708 = sbr.rel (%p1706) target = $region100
        $region99: #{fft_block.1} parent=95 // pred_region
          %s1709 = sand.u32 %s402, 1
          %s1710 = scalar_lea.sflag [#allocation4], %s1709
          %s1711 = sand.u32 %s402, 1
          %s1712 = smul.addr %s1711, 16
          %s1713 = scalar_lea.vmem [#allocation3], %s1712
          %1715 = dma.done %s1710, 256
        $region100: #{fft_block.1} parent=95 // pred_fallthru
          _
      $region96: #{fft_block.1} parent=5 // pred_fallthru
        _
    $region6: #{fft_block.1} parent=1 // loop_footer
      %s30 = sadd.s32 1, %s26
    $region7: #{fft_block.1} parent=1 // loop_footer_branch
      %25 = sbr.rel target = $region3
    $region8: #{fft_block.1} parent=1 // loop_exit
      _
    %1716 = vsyncpa [#allocation4], 1
    %s1717 = scalar_lea.sflag [#allocation4], 1
    %1718 = vsyncpa %s1717, 1

</llo_original>
